<compile_context>
chip_gen: v6e
topology: v6e:2x2x1
jax: 0.10.0
libtpu: 0.0.40
codegen_flags: <defaults>
</compile_context>

<pallas_src>
import functools

import jax
import jax.numpy as jnp
from jax.experimental import pallas as pl
from jax.experimental.pallas import tpu as pltpu

EPS = 1e-3


def _conv1x1_bn_kernel(w_ref, x_ref, g_ref, b_ref, o_ref, *, inv_m, chunk):
    # w_ref: (rows, Cin) f32   (rows = Cout per grid block)
    # x_ref: (Cin, M)    f32   (M = N*H*W, channels-first)
    # g_ref/b_ref: (rows, 1) f32
    # o_ref: (rows, M)   f32
    #
    # In-kernel bf16 cast of the activations (folded from the wrapper).
    xb = x_ref[...].astype(jnp.bfloat16)                              # (Cin, M)
    # Pre-reduced x (small Cin-row XLU reduce, done once for all chunks); the
    # per-channel mean of y is then a tiny matmul: mean = (W @ sum_j x_j)/M.
    xs = jnp.sum(xb.astype(jnp.float32), axis=-1, keepdims=True)      # (Cin, 1)

    n_chunks = o_ref.shape[0] // chunk

    def body(c, carry):
        r0 = pl.multiple_of(c * chunk, chunk)
        wc = w_ref[pl.ds(r0, chunk), :].astype(jnp.bfloat16)          # (chunk, Cin)
        # Per-channel mean via the (bf16-rounded) weights, consistent with y.
        mean = jnp.dot(wc.astype(jnp.float32), xs,
                       preferred_element_type=jnp.float32) * inv_m    # (chunk, 1)
        # Main MXU matmul for this Cout slab.
        y = jnp.dot(wc, xb, preferred_element_type=jnp.float32)       # (chunk, M)
        yc = y - mean                                                 # centered
        var = jnp.sum(yc * yc, axis=-1, keepdims=True) * inv_m        # biased var
        scale = g_ref[pl.ds(r0, chunk), :] * jax.lax.rsqrt(var + EPS)
        shift = b_ref[pl.ds(r0, chunk), :]
        o_ref[pl.ds(r0, chunk), :] = (yc * scale + shift).astype(o_ref.dtype)
        return carry

    jax.lax.fori_loop(0, n_chunks, body, 0, unroll=True)


def _is_v7x() -> bool:
    try:
        kind = jax.devices()[0].device_kind.lower()
    except Exception:  # pragma: no cover - defensive
        return False
    return ("v7" in kind) or ("tpu7" in kind)


def _pick_chunk(rows: int) -> int:
    for c in (96, 72, 64, 48, 32, 16, 8):
        if rows % c == 0:
            return c
    return rows


def conv1x1_bn(x_nchw, weight_oi, gamma, beta):
    """x_nchw: (N, Cin, H, W); weight_oi: (Cout, Cin); gamma/beta: (Cout,)."""
    N, Cin, H, W = x_nchw.shape
    Cout = weight_oi.shape[0]
    M = N * H * W

    # Channels-first flatten (layout no-op for N=1).  NO dtype casts here —
    # the bf16 casts are folded into the kernel.
    x2d = jnp.transpose(x_nchw, (1, 0, 2, 3)).reshape(Cin, M)
    w2d = weight_oi.reshape(Cout, Cin)
    g2d = gamma.reshape(Cout, 1).astype(jnp.float32)
    b2d = beta.reshape(Cout, 1).astype(jnp.float32)

    # 2-way Cout split only where there are 2 TensorCores (v7x).
    nblk = 2 if (_is_v7x() and Cout % 2 == 0 and (Cout // 2) % 8 == 0) else 1
    rows = Cout // nblk
    chunk = _pick_chunk(rows)

    kernel = functools.partial(_conv1x1_bn_kernel, inv_m=1.0 / M, chunk=chunk)

    grid_spec = pltpu.PrefetchScalarGridSpec(
        num_scalar_prefetch=0,
        grid=(nblk,),
        in_specs=[
            pl.BlockSpec((rows, Cin), lambda i: (i, 0)),   # weights (split over Cout)
            pl.BlockSpec((Cin, M), lambda i: (0, 0)),      # activations (shared)
            pl.BlockSpec((rows, 1), lambda i: (i, 0)),     # gamma
            pl.BlockSpec((rows, 1), lambda i: (i, 0)),     # beta
        ],
        out_specs=pl.BlockSpec((rows, M), lambda i: (i, 0)),
    )

    cost = pl.CostEstimate(
        flops=2 * Cout * Cin * M,
        transcendentals=Cout,
        bytes_accessed=4 * (Cin * M + Cout * Cin + Cout * M + 2 * Cout),
    )

    out2d = pl.pallas_call(
        kernel,
        out_shape=jax.ShapeDtypeStruct((Cout, M), jnp.float32),
        grid_spec=grid_spec,
        compiler_params=pltpu.CompilerParams(
            dimension_semantics=("parallel",)),
        cost_estimate=cost,
    )(w2d, x2d, g2d, b2d)

    # (Cout, N*H*W) -> (N, Cout, H, W).  Free reshape for N=1.
    return out2d.reshape(Cout, N, H, W).transpose(1, 0, 2, 3)


def _reference(x_nchw, weight_oi, gamma, beta):
    # Pure-JAX f32 reference: 1x1 conv + training-mode BatchNorm2d.
    y = jnp.einsum("oi,nihw->nohw", weight_oi, x_nchw)
    mean = jnp.mean(y, axis=(0, 2, 3), keepdims=True)
    var = jnp.mean((y - mean) ** 2, axis=(0, 2, 3), keepdims=True)
    return (y - mean) * jax.lax.rsqrt(var + EPS) * gamma.reshape(1, -1, 1, 1) \
        + beta.reshape(1, -1, 1, 1)


if __name__ == "__main__":
    key = jax.random.PRNGKey(0)
    k_x, k_w, k_g, k_b = jax.random.split(key, 4)

    # Shapes from the module: input (1, 48, 14, 14), Conv2d(48 -> 288, 1x1, no bias)
    N, Cin, H, W = 1, 48, 14, 14
    Cout = 288

    x = jax.random.normal(k_x, (N, Cin, H, W), dtype=jnp.float32)
    weight = jax.random.normal(k_w, (Cout, Cin), dtype=jnp.float32) * (1.0 / Cin) ** 0.5
    gamma = 1.0 + 0.1 * jax.random.normal(k_g, (Cout,), dtype=jnp.float32)
    beta = 0.1 * jax.random.normal(k_b, (Cout,), dtype=jnp.float32)

    fn = jax.jit(conv1x1_bn)
    out = fn(x, weight, gamma, beta)
    jax.block_until_ready(out)
    assert out.shape == (N, Cout, H, W), out.shape

    # Sanity-check vs f32 reference (loose tol: bf16 matmul inputs, f32 accum;
    # BN renormalization absorbs most of the quantization error).
    ref = _reference(x, weight, gamma, beta)
    max_err = float(jnp.max(jnp.abs(out - ref)))
    assert max_err < 5e-2, f"max abs err {max_err}"

    print("KERNEL_OK")
</pallas_src>

<mosaic_0001>
module attributes {stable_mosaic.version = 11 : i64} {
  func.func @_conv1x1_bn_kernel(%arg0: i32, %arg1: memref<288x48xf32, #tpu.memory_space<vmem>>, %arg2: memref<48x196xf32, #tpu.memory_space<vmem>>, %arg3: memref<288x1xf32, #tpu.memory_space<vmem>>, %arg4: memref<288x1xf32, #tpu.memory_space<vmem>>, %arg5: memref<288x196xf32, #tpu.memory_space<vmem>>) attributes {dimension_semantics = [#tpu.dimension_semantics<parallel>], iteration_bounds = array<i64: 1>, scalar_prefetch = 0 : i64, scratch_operands = 0 : i64, tpu.core_type = #tpu.core_type<tc>, window_params = [{transform_indices = @transform_0, window_bounds = array<i64: 288, 48>}, {pipeline_mode = #tpu.pipeline_mode<synchronous>, transform_indices = @transform_1, window_bounds = array<i64: 48, 196>}, {transform_indices = @transform_2, window_bounds = array<i64: 288, 1>}, {transform_indices = @transform_3, window_bounds = array<i64: 288, 1>}, {transform_indices = @transform_4, window_bounds = array<i64: 288, 196>}]} {
    %c0 = arith.constant 0 : index
    %c0_0 = arith.constant 0 : index
    %0 = vector.load %arg2[%c0, %c0_0] : memref<48x196xf32, #tpu.memory_space<vmem>>, vector<48x196xf32>
    %1 = arith.truncf %0 : vector<48x196xf32> to vector<48x196xbf16>
    %2 = arith.extf %1 : vector<48x196xbf16> to vector<48x196xf32>
    %cst = arith.constant dense<0.000000e+00> : vector<48xf32>
    %3 = vector.multi_reduction <add>, %2, %cst [1] : vector<48x196xf32> to vector<48xf32>
    %4 = vector.shape_cast %3 : vector<48xf32> to vector<48x1xf32>
    %c0_i32 = arith.constant 0 : i32
    %c96_i32 = arith.constant 96 : i32
    %5 = arith.muli %c0_i32, %c96_i32 : i32
    %6 = tpu.assume_multiple %5, 96 : i32
    %7 = arith.index_cast %6 : i32 to index
    %c0_1 = arith.constant 0 : index
    %8 = vector.load %arg1[%7, %c0_1] : memref<288x48xf32, #tpu.memory_space<vmem>>, vector<96x48xf32>
    %9 = arith.truncf %8 : vector<96x48xf32> to vector<96x48xbf16>
    %10 = arith.extf %9 : vector<96x48xbf16> to vector<96x48xf32>
    %cst_2 = arith.constant dense<0.000000e+00> : vector<96x1xf32>
    %11 = tpu.matmul %10, %4, %cst_2 {dimension_numbers = #tpu.dot_dimension_numbers<[1], [0], [0], [1], [0, 0, 1, 1], [], []>} : vector<96x48xf32>, vector<48x1xf32>, vector<96x1xf32> -> vector<96x1xf32>
    %cst_3 = arith.constant 0.00510204071 : f32
    %12 = vector.broadcast %cst_3 : f32 to vector<96x1xf32>
    %13 = arith.mulf %11, %12 : vector<96x1xf32>
    %cst_4 = arith.constant dense<0.000000e+00> : vector<96x196xf32>
    %14 = tpu.matmul %9, %1, %cst_4 {dimension_numbers = #tpu.dot_dimension_numbers<[1], [0], [0], [1], [0, 0, 1, 1], [], []>} : vector<96x48xbf16>, vector<48x196xbf16>, vector<96x196xf32> -> vector<96x196xf32>
    %15 = vector.broadcast %13 : vector<96x1xf32> to vector<96x196xf32>
    %16 = arith.subf %14, %15 : vector<96x196xf32>
    %17 = arith.mulf %16, %16 : vector<96x196xf32>
    %cst_5 = arith.constant dense<0.000000e+00> : vector<96xf32>
    %18 = vector.multi_reduction <add>, %17, %cst_5 [1] : vector<96x196xf32> to vector<96xf32>
    %19 = vector.shape_cast %18 : vector<96xf32> to vector<96x1xf32>
    %cst_6 = arith.constant 0.00510204071 : f32
    %20 = vector.broadcast %cst_6 : f32 to vector<96x1xf32>
    %21 = arith.mulf %19, %20 : vector<96x1xf32>
    %22 = arith.index_cast %6 : i32 to index
    %c0_7 = arith.constant 0 : index
    %23 = vector.load %arg3[%22, %c0_7] : memref<288x1xf32, #tpu.memory_space<vmem>>, vector<96x1xf32>
    %cst_8 = arith.constant 1.000000e-03 : f32
    %24 = vector.broadcast %cst_8 : f32 to vector<96x1xf32>
    %25 = arith.addf %21, %24 : vector<96x1xf32>
    %26 = math.rsqrt %25 : vector<96x1xf32>
    %27 = arith.mulf %23, %26 : vector<96x1xf32>
    %28 = arith.index_cast %6 : i32 to index
    %c0_9 = arith.constant 0 : index
    %29 = vector.load %arg4[%28, %c0_9] : memref<288x1xf32, #tpu.memory_space<vmem>>, vector<96x1xf32>
    %30 = vector.broadcast %27 : vector<96x1xf32> to vector<96x196xf32>
    %31 = arith.mulf %16, %30 : vector<96x196xf32>
    %32 = vector.broadcast %29 : vector<96x1xf32> to vector<96x196xf32>
    %33 = arith.addf %31, %32 : vector<96x196xf32>
    %34 = arith.index_cast %6 : i32 to index
    %c0_10 = arith.constant 0 : index
    %35 = vector.load %arg5[%34, %c0_10] : memref<288x196xf32, #tpu.memory_space<vmem>>, vector<96x196xf32>
    tpu.vector_store %arg5[%34, %c0_10], %33 {strides = array<i32>} : memref<288x196xf32, #tpu.memory_space<vmem>>, vector<96x196xf32>,
    %c1_i32 = arith.constant 1 : i32
    %c96_i32_11 = arith.constant 96 : i32
    %36 = arith.muli %c1_i32, %c96_i32_11 : i32
    %37 = tpu.assume_multiple %36, 96 : i32
    %38 = arith.index_cast %37 : i32 to index
    %c0_12 = arith.constant 0 : index
    %39 = vector.load %arg1[%38, %c0_12] : memref<288x48xf32, #tpu.memory_space<vmem>>, vector<96x48xf32>
    %40 = arith.truncf %39 : vector<96x48xf32> to vector<96x48xbf16>
    %41 = arith.extf %40 : vector<96x48xbf16> to vector<96x48xf32>
    %cst_13 = arith.constant dense<0.000000e+00> : vector<96x1xf32>
    %42 = tpu.matmul %41, %4, %cst_13 {dimension_numbers = #tpu.dot_dimension_numbers<[1], [0], [0], [1], [0, 0, 1, 1], [], []>} : vector<96x48xf32>, vector<48x1xf32>, vector<96x1xf32> -> vector<96x1xf32>
    %cst_14 = arith.constant 0.00510204071 : f32
    %43 = vector.broadcast %cst_14 : f32 to vector<96x1xf32>
    %44 = arith.mulf %42, %43 : vector<96x1xf32>
    %cst_15 = arith.constant dense<0.000000e+00> : vector<96x196xf32>
    %45 = tpu.matmul %40, %1, %cst_15 {dimension_numbers = #tpu.dot_dimension_numbers<[1], [0], [0], [1], [0, 0, 1, 1], [], []>} : vector<96x48xbf16>, vector<48x196xbf16>, vector<96x196xf32> -> vector<96x196xf32>
    %46 = vector.broadcast %44 : vector<96x1xf32> to vector<96x196xf32>
    %47 = arith.subf %45, %46 : vector<96x196xf32>
    %48 = arith.mulf %47, %47 : vector<96x196xf32>
    %cst_16 = arith.constant dense<0.000000e+00> : vector<96xf32>
    %49 = vector.multi_reduction <add>, %48, %cst_16 [1] : vector<96x196xf32> to vector<96xf32>
    %50 = vector.shape_cast %49 : vector<96xf32> to vector<96x1xf32>
    %cst_17 = arith.constant 0.00510204071 : f32
    %51 = vector.broadcast %cst_17 : f32 to vector<96x1xf32>
    %52 = arith.mulf %50, %51 : vector<96x1xf32>
    %53 = arith.index_cast %37 : i32 to index
    %c0_18 = arith.constant 0 : index
    %54 = vector.load %arg3[%53, %c0_18] : memref<288x1xf32, #tpu.memory_space<vmem>>, vector<96x1xf32>
    %cst_19 = arith.constant 1.000000e-03 : f32
    %55 = vector.broadcast %cst_19 : f32 to vector<96x1xf32>
    %56 = arith.addf %52, %55 : vector<96x1xf32>
    %57 = math.rsqrt %56 : vector<96x1xf32>
    %58 = arith.mulf %54, %57 : vector<96x1xf32>
    %59 = arith.index_cast %37 : i32 to index
    %c0_20 = arith.constant 0 : index
    %60 = vector.load %arg4[%59, %c0_20] : memref<288x1xf32, #tpu.memory_space<vmem>>, vector<96x1xf32>
    %61 = vector.broadcast %58 : vector<96x1xf32> to vector<96x196xf32>
    %62 = arith.mulf %47, %61 : vector<96x196xf32>
    %63 = vector.broadcast %60 : vector<96x1xf32> to vector<96x196xf32>
    %64 = arith.addf %62, %63 : vector<96x196xf32>
    %65 = arith.index_cast %37 : i32 to index
    %c0_21 = arith.constant 0 : index
    %66 = vector.load %arg5[%65, %c0_21] : memref<288x196xf32, #tpu.memory_space<vmem>>, vector<96x196xf32>
    tpu.vector_store %arg5[%65, %c0_21], %64 {strides = array<i32>} : memref<288x196xf32, #tpu.memory_space<vmem>>, vector<96x196xf32>,
    %c2_i32 = arith.constant 2 : i32
    %c96_i32_22 = arith.constant 96 : i32
    %67 = arith.muli %c2_i32, %c96_i32_22 : i32
    %68 = tpu.assume_multiple %67, 96 : i32
    %69 = arith.index_cast %68 : i32 to index
    %c0_23 = arith.constant 0 : index
    %70 = vector.load %arg1[%69, %c0_23] : memref<288x48xf32, #tpu.memory_space<vmem>>, vector<96x48xf32>
    %71 = arith.truncf %70 : vector<96x48xf32> to vector<96x48xbf16>
    %72 = arith.extf %71 : vector<96x48xbf16> to vector<96x48xf32>
    %cst_24 = arith.constant dense<0.000000e+00> : vector<96x1xf32>
    %73 = tpu.matmul %72, %4, %cst_24 {dimension_numbers = #tpu.dot_dimension_numbers<[1], [0], [0], [1], [0, 0, 1, 1], [], []>} : vector<96x48xf32>, vector<48x1xf32>, vector<96x1xf32> -> vector<96x1xf32>
    %cst_25 = arith.constant 0.00510204071 : f32
    %74 = vector.broadcast %cst_25 : f32 to vector<96x1xf32>
    %75 = arith.mulf %73, %74 : vector<96x1xf32>
    %cst_26 = arith.constant dense<0.000000e+00> : vector<96x196xf32>
    %76 = tpu.matmul %71, %1, %cst_26 {dimension_numbers = #tpu.dot_dimension_numbers<[1], [0], [0], [1], [0, 0, 1, 1], [], []>} : vector<96x48xbf16>, vector<48x196xbf16>, vector<96x196xf32> -> vector<96x196xf32>
    %77 = vector.broadcast %75 : vector<96x1xf32> to vector<96x196xf32>
    %78 = arith.subf %76, %77 : vector<96x196xf32>
    %79 = arith.mulf %78, %78 : vector<96x196xf32>
    %cst_27 = arith.constant dense<0.000000e+00> : vector<96xf32>
    %80 = vector.multi_reduction <add>, %79, %cst_27 [1] : vector<96x196xf32> to vector<96xf32>
    %81 = vector.shape_cast %80 : vector<96xf32> to vector<96x1xf32>
    %cst_28 = arith.constant 0.00510204071 : f32
    %82 = vector.broadcast %cst_28 : f32 to vector<96x1xf32>
    %83 = arith.mulf %81, %82 : vector<96x1xf32>
    %84 = arith.index_cast %68 : i32 to index
    %c0_29 = arith.constant 0 : index
    %85 = vector.load %arg3[%84, %c0_29] : memref<288x1xf32, #tpu.memory_space<vmem>>, vector<96x1xf32>
    %cst_30 = arith.constant 1.000000e-03 : f32
    %86 = vector.broadcast %cst_30 : f32 to vector<96x1xf32>
    %87 = arith.addf %83, %86 : vector<96x1xf32>
    %88 = math.rsqrt %87 : vector<96x1xf32>
    %89 = arith.mulf %85, %88 : vector<96x1xf32>
    %90 = arith.index_cast %68 : i32 to index
    %c0_31 = arith.constant 0 : index
    %91 = vector.load %arg4[%90, %c0_31] : memref<288x1xf32, #tpu.memory_space<vmem>>, vector<96x1xf32>
    %92 = vector.broadcast %89 : vector<96x1xf32> to vector<96x196xf32>
    %93 = arith.mulf %78, %92 : vector<96x196xf32>
    %94 = vector.broadcast %91 : vector<96x1xf32> to vector<96x196xf32>
    %95 = arith.addf %93, %94 : vector<96x196xf32>
    %96 = arith.index_cast %68 : i32 to index
    %c0_32 = arith.constant 0 : index
    %97 = vector.load %arg5[%96, %c0_32] : memref<288x196xf32, #tpu.memory_space<vmem>>, vector<96x196xf32>
    tpu.vector_store %arg5[%96, %c0_32], %95 {strides = array<i32>} : memref<288x196xf32, #tpu.memory_space<vmem>>, vector<96x196xf32>,
    %c3_i32 = arith.constant 3 : i32
    return
  }
  func.func @transform_0(%arg0: i32) -> (i32, i32) {
    %c0_i32 = arith.constant 0 : i32
    %c0_i32_0 = arith.constant 0 : i32
    return %arg0, %c0_i32 : i32, i32
  }
  func.func @transform_1(%arg0: i32) -> (i32, i32) {
    %c0_i32 = arith.constant 0 : i32
    %c0_i32_0 = arith.constant 0 : i32
    %c0_i32_1 = arith.constant 0 : i32
    return %c0_i32, %c0_i32_0 : i32, i32
  }
  func.func @transform_2(%arg0: i32) -> (i32, i32) {
    %c0_i32 = arith.constant 0 : i32
    %c0_i32_0 = arith.constant 0 : i32
    return %arg0, %c0_i32 : i32, i32
  }
  func.func @transform_3(%arg0: i32) -> (i32, i32) {
    %c0_i32 = arith.constant 0 : i32
    %c0_i32_0 = arith.constant 0 : i32
    return %arg0, %c0_i32 : i32, i32
  }
  func.func @transform_4(%arg0: i32) -> (i32, i32) {
    %c0_i32 = arith.constant 0 : i32
    %c0_i32_0 = arith.constant 0 : i32
    return %arg0, %c0_i32 : i32, i32
  }
}

</mosaic_0001>

<llo_original>
// kernel: conv1x1_bn.1
$region0: #{conv1x1_bn.1}
  #allocation0 [shape = 'u32[]', space=smem, size = 0x4, offset = 0x4, fixed_abs, tag = 'smem constant byte address 0x4 - core index']
  #allocation1 [shape = 'u32[144,128]{1,0:T(1,128)}', space=vmem, size = 0x12000, scoped, tag = 'internal scratch']
  %s0 = inlined_call_operand.vmem [shape: f32[288,48], index: 0, kind: input, shape index: {}]
  %s1 = inlined_call_operand.vmem [shape: f32[48,196], index: 1, kind: input, shape index: {}]
  %s2 = inlined_call_operand.vmem [shape: f32[288,1], index: 2, kind: input, shape index: {}]
  %s3 = inlined_call_operand.vmem [shape: f32[288,1], index: 3, kind: input, shape index: {}]
  %s4 = inlined_call_operand.vmem [shape: f32[288,196], index: 4, kind: output, shape index: {}]
  %s5 = sld [smem:[#allocation0]]
  $region26: #{conv1x1_bn.1} parent=0
    _
  %s7 = ssub.s32 1, %s5
  %s8 = scalar_select 0, %s7, %s5
  // Predicated region
  $region2: #{conv1x1_bn.1} parent=0 // pred_check
    _
  $region3: #{conv1x1_bn.1} parent=0 // pred_check_branch
    %10 = sbr.rel (0) target = $region5
  $region4: #{conv1x1_bn.1} parent=0 // pred_region
    _
  $region5: #{conv1x1_bn.1} parent=0 // pred_fallthru
    _
  // Predicated region
  $region6: #{conv1x1_bn.1} parent=0 // pred_check
    _
  $region7: #{conv1x1_bn.1} parent=0 // pred_check_branch
    %12 = sbr.rel (0) target = $region9
  $region8: #{conv1x1_bn.1} parent=0 // pred_region
    _
  $region9: #{conv1x1_bn.1} parent=0 // pred_fallthru
    _
  // Predicated region
  $region10: #{conv1x1_bn.1} parent=0 // pred_check
    _
  $region11: #{conv1x1_bn.1} parent=0 // pred_check_branch
    %14 = sbr.rel (0) target = $region13
  $region12: #{conv1x1_bn.1} parent=0 // pred_region
    _
  $region13: #{conv1x1_bn.1} parent=0 // pred_fallthru
    _
  // Predicated region
  $region14: #{conv1x1_bn.1} parent=0 // pred_check
    _
  $region15: #{conv1x1_bn.1} parent=0 // pred_check_branch
    %16 = sbr.rel (0) target = $region17
  $region16: #{conv1x1_bn.1} parent=0 // pred_region
    _
  $region17: #{conv1x1_bn.1} parent=0 // pred_fallthru
    _
  %v18 = vld [vmem:[%s1] sm:$0xff]
  %v19 = vld [vmem:[%s1 + $0x8] sm:$0xff]
  %v20 = vld [vmem:[%s1 + $0x10] sm:$0xff]
  %v21 = vld [vmem:[%s1 + $0x18] sm:$0xff]
  %v22 = vld [vmem:[%s1 + $0x20] sm:$0xff]
  %v23 = vld [vmem:[%s1 + $0x28] sm:$0xff]
  %v24 = vld [vmem:[%s1 + $0x30] sm:$0xff]
  %v25 = vld [vmem:[%s1 + $0x38] sm:$0xff]
  %v26 = vld [vmem:[%s1 + $0x40] sm:$0xff]
  %v27 = vld [vmem:[%s1 + $0x48] sm:$0xff]
  %v28 = vld [vmem:[%s1 + $0x50] sm:$0xff]
  %v29 = vld [vmem:[%s1 + $0x58] sm:$0xff]
  %v30 = vpack.c.bf16 %v20, %v18
  %v31 = vpack.c.bf16 %v21, %v19
  %v32 = vpack.c.bf16 %v24, %v22
  %v33 = vpack.c.bf16 %v25, %v23
  %v34 = vpack.c.bf16 %v28, %v26
  %v35 = vpack.c.bf16 %v29, %v27
  %v36 = vunpack.c.l.bf16 %v30
  %v37 = vunpack.c.l.bf16 %v31
  %v38 = vunpack.c.h.bf16 %v30
  %v39 = vunpack.c.h.bf16 %v31
  %v40 = vunpack.c.l.bf16 %v32
  %v41 = vunpack.c.l.bf16 %v33
  %v42 = vunpack.c.h.bf16 %v32
  %v43 = vunpack.c.h.bf16 %v33
  %v44 = vunpack.c.l.bf16 %v34
  %v45 = vunpack.c.l.bf16 %v35
  %v46 = vunpack.c.h.bf16 %v34
  %v47 = vunpack.c.h.bf16 %v35
  %vm48 = vcmask 556032
  %v49 = vsel %vm48, %v37, 0.0
  %v50 = vadd.f32 %v36, %v49
  %51 = vadd.xlane.f32.xlu0 %v50
  %v52 = vpop.xlane.xlu0 %51
  %v53 = vsel %vm48, %v39, 0.0
  %v54 = vadd.f32 %v38, %v53
  %55 = vadd.xlane.f32.xlu0 %v54
  %v56 = vpop.xlane.xlu0 %55
  %v57 = vsel %vm48, %v41, 0.0
  %v58 = vadd.f32 %v40, %v57
  %59 = vadd.xlane.f32.xlu0 %v58
  %v60 = vpop.xlane.xlu0 %59
  %v61 = vsel %vm48, %v43, 0.0
  %v62 = vadd.f32 %v42, %v61
  %63 = vadd.xlane.f32.xlu0 %v62
  %v64 = vpop.xlane.xlu0 %63
  %v65 = vsel %vm48, %v45, 0.0
  %v66 = vadd.f32 %v44, %v65
  %67 = vadd.xlane.f32.xlu0 %v66
  %v68 = vpop.xlane.xlu0 %67
  %v69 = vsel %vm48, %v47, 0.0
  %v70 = vadd.f32 %v46, %v69
  %71 = vadd.xlane.f32.xlu0 %v70
  %v72 = vpop.xlane.xlu0 %71
  %v73 = vld [vmem:[%s0] sm:$0xff]
  %v74 = vld [vmem:[%s0 + $0x8] sm:$0xff]
  %v75 = vld [vmem:[%s0 + $0x10] sm:$0xff]
  %v76 = vld [vmem:[%s0 + $0x18] sm:$0xff]
  %v77 = vld [vmem:[%s0 + $0x20] sm:$0xff]
  %v78 = vld [vmem:[%s0 + $0x28] sm:$0xff]
  %v79 = vld [vmem:[%s0 + $0x30] sm:$0xff]
  %v80 = vld [vmem:[%s0 + $0x38] sm:$0xff]
  %v81 = vld [vmem:[%s0 + $0x40] sm:$0xff]
  %v82 = vld [vmem:[%s0 + $0x48] sm:$0xff]
  %v83 = vld [vmem:[%s0 + $0x50] sm:$0xff]
  %v84 = vld [vmem:[%s0 + $0x58] sm:$0xff]
  %v85 = vpack.c.bf16 %v74, %v73
  %v86 = vpack.c.bf16 %v76, %v75
  %v87 = vpack.c.bf16 %v78, %v77
  %v88 = vpack.c.bf16 %v80, %v79
  %v89 = vpack.c.bf16 %v82, %v81
  %v90 = vpack.c.bf16 %v84, %v83
  %v91 = vunpack.c.l.bf16 %v85
  %v92 = vunpack.c.h.bf16 %v85
  %v93 = vunpack.c.l.bf16 %v86
  %v94 = vunpack.c.h.bf16 %v86
  %v95 = vunpack.c.l.bf16 %v87
  %v96 = vunpack.c.h.bf16 %v87
  %v97 = vunpack.c.l.bf16 %v88
  %v98 = vunpack.c.h.bf16 %v88
  %v99 = vunpack.c.l.bf16 %v89
  %v100 = vunpack.c.h.bf16 %v89
  %v101 = vunpack.c.l.bf16 %v90
  %v102 = vunpack.c.h.bf16 %v90
  %vm103 = vcmask 392192
  %v105 = vsel %vm103, %v91, 0
  %v108 = vsel %vm103, %v92, 0
  %v111 = vsel %vm103, %v93, 0
  %v114 = vsel %vm103, %v94, 0
  %v117 = vsel %vm103, %v95, 0
  %v120 = vsel %vm103, %v96, 0
  %v123 = vsel %vm103, %v97, 0
  %v126 = vsel %vm103, %v98, 0
  %v129 = vsel %vm103, %v99, 0
  %v132 = vsel %vm103, %v100, 0
  %v135 = vsel %vm103, %v101, 0
  %v138 = vsel %vm103, %v102, 0
  %140 = vmatprep.subr.mxu0 0.0
  %141 = vmatpush1.msra.mxu0 0.0
  %142 = vmatprep.subr.mxu0 0.0
  %143 = vmatpush1.msra.mxu0 0.0
  %144 = vmatprep.subr.mxu0 0.0
  %145 = vmatpush1.msra.mxu0 0.0
  %146 = vmatprep.subr.mxu0 0.0
  %147 = vmatpush1.msra.mxu0 0.0
  %148 = vmatprep.subr.mxu0 0.0
  %149 = vmatpush1.msra.mxu0 0.0
  %150 = vmatprep.subr.mxu0 0.0
  %151 = vmatpush1.msra.mxu0 0.0
  %152 = vmatprep.subr.mxu0 0.0
  %153 = vmatpush1.msra.mxu0 0.0
  %154 = vmatprep.subr.mxu0 0.0
  %155 = vmatpush1.msra.mxu0 0.0
  %156 = vmatprep.subr.mxu0 0.0
  %157 = vmatpush1.msra.mxu0 0.0
  %158 = vmatprep.subr.mxu0 0.0
  %159 = vmatpush1.msra.mxu0 0.0
  %160 = vmatprep.subr.mxu0 0.0
  %161 = vmatpush1.msra.mxu0 %v72
  %162 = vmatprep.subr.mxu0 0.0
  %163 = vmatpush1.msra.mxu0 %v68
  %164 = vmatprep.subr.mxu0 0.0
  %165 = vmatpush1.msra.mxu0 %v64
  %166 = vmatprep.subr.mxu0 0.0
  %167 = vmatpush1.msra.mxu0 %v60
  %168 = vmatprep.subr.mxu0 0.0
  %169 = vmatpush1.msra.mxu0 %v56
  %170 = vmatprep.subr.mxu0 0.0
  %171 = vmatpush1.msra.mxu0 %v52
  %172 = vmatprep.subr.mxu0 0.0
  %173 = vmatpush2.msra.mxu0 0.0
  %174 = vmatprep.subr.mxu0 0.0
  %175 = vmatpush2.msra.mxu0 0.0
  %176 = vmatprep.subr.mxu0 0.0
  %177 = vmatpush2.msra.mxu0 0.0
  %178 = vmatprep.subr.mxu0 0.0
  %179 = vmatpush2.msra.mxu0 0.0
  %180 = vmatprep.subr.mxu0 0.0
  %181 = vmatpush2.msra.mxu0 0.0
  %182 = vmatprep.subr.mxu0 0.0
  %183 = vmatpush2.msra.mxu0 0.0
  %184 = vmatprep.subr.mxu0 0.0
  %185 = vmatpush2.msra.mxu0 0.0
  %186 = vmatprep.subr.mxu0 0.0
  %187 = vmatpush2.msra.mxu0 0.0
  %188 = vmatprep.subr.mxu0 0.0
  %189 = vmatpush2.msra.mxu0 0.0
  %190 = vmatprep.subr.mxu0 0.0
  %191 = vmatpush2.msra.mxu0 0.0
  %192 = vmatprep.subr.mxu0 0.0
  %193 = vmatpush2.msra.mxu0 0.0
  %194 = vmatprep.subr.mxu0 0.0
  %195 = vmatpush2.msra.mxu0 0.0
  %196 = vmatprep.subr.mxu0 0.0
  %197 = vmatpush2.msra.mxu0 0.0
  %198 = vmatprep.subr.mxu0 0.0
  %199 = vmatpush2.msra.mxu0 0.0
  %200 = vmatprep.subr.mxu0 0.0
  %201 = vmatpush2.msra.mxu0 0.0
  %202 = vmatprep.subr.mxu0 0.0
  %203 = vmatpush2.msra.mxu0 0.0
  %204 = vmatprep.mubr.f32.mxu0 0.0
  %205 = vmatmul.mubr.f32.gmra.mxu0 %v105
  %v206 = vpop.f32.mrf.mxu0
  %v207 = vadd.f32 0.0, %v206
  %v208 = vpop.f32.mrf.mxu0
  %209 = vmatprep.mubr.f32.mxu0 0.0
  %210 = vmatmul.mubr.f32.gmra.mxu0 %v108
  %v211 = vpop.f32.mrf.mxu0
  %v212 = vadd.f32 0.0, %v211
  %v213 = vpop.f32.mrf.mxu0
  %214 = vmatprep.mubr.f32.mxu0 0.0
  %215 = vmatmul.mubr.f32.gmra.mxu0 %v111
  %v216 = vpop.f32.mrf.mxu0
  %v217 = vadd.f32 0.0, %v216
  %v218 = vpop.f32.mrf.mxu0
  %219 = vmatprep.mubr.f32.mxu0 0.0
  %220 = vmatmul.mubr.f32.gmra.mxu0 %v114
  %v221 = vpop.f32.mrf.mxu0
  %v222 = vadd.f32 0.0, %v221
  %v223 = vpop.f32.mrf.mxu0
  %224 = vmatprep.mubr.f32.mxu0 0.0
  %225 = vmatmul.mubr.f32.gmra.mxu0 %v117
  %v226 = vpop.f32.mrf.mxu0
  %v227 = vadd.f32 0.0, %v226
  %v228 = vpop.f32.mrf.mxu0
  %229 = vmatprep.mubr.f32.mxu0 0.0
  %230 = vmatmul.mubr.f32.gmra.mxu0 %v120
  %v231 = vpop.f32.mrf.mxu0
  %v232 = vadd.f32 0.0, %v231
  %v233 = vpop.f32.mrf.mxu0
  %234 = vmatprep.mubr.f32.mxu0 0.0
  %235 = vmatmul.mubr.f32.gmra.mxu0 %v123
  %v236 = vpop.f32.mrf.mxu0
  %v237 = vadd.f32 0.0, %v236
  %v238 = vpop.f32.mrf.mxu0
  %239 = vmatprep.mubr.f32.mxu0 0.0
  %240 = vmatmul.mubr.f32.gmra.mxu0 %v126
  %v241 = vpop.f32.mrf.mxu0
  %v242 = vadd.f32 0.0, %v241
  %v243 = vpop.f32.mrf.mxu0
  %244 = vmatprep.mubr.f32.mxu0 0.0
  %245 = vmatmul.mubr.f32.gmra.mxu0 %v129
  %v246 = vpop.f32.mrf.mxu0
  %v247 = vadd.f32 0.0, %v246
  %v248 = vpop.f32.mrf.mxu0
  %249 = vmatprep.mubr.f32.mxu0 0.0
  %250 = vmatmul.mubr.f32.gmra.mxu0 %v132
  %v251 = vpop.f32.mrf.mxu0
  %v252 = vadd.f32 0.0, %v251
  %v253 = vpop.f32.mrf.mxu0
  %254 = vmatprep.mubr.f32.mxu0 0.0
  %255 = vmatmul.mubr.f32.gmra.mxu0 %v135
  %v256 = vpop.f32.mrf.mxu0
  %v257 = vadd.f32 0.0, %v256
  %v258 = vpop.f32.mrf.mxu0
  %259 = vmatprep.mubr.f32.mxu0 0.0
  %260 = vmatmul.mubr.f32.gmra.mxu0 %v138
  %v261 = vpop.f32.mrf.mxu0
  %v262 = vadd.f32 0.0, %v261
  %v263 = vpop.f32.mrf.mxu0
  %264 = vdwg.mxu0
  %v265 = vmul.f32 %v207, 0.0051020407
  %v266 = vmul.f32 %v212, 0.0051020407
  %v267 = vmul.f32 %v217, 0.0051020407
  %v268 = vmul.f32 %v222, 0.0051020407
  %v269 = vmul.f32 %v227, 0.0051020407
  %v270 = vmul.f32 %v232, 0.0051020407
  %v271 = vmul.f32 %v237, 0.0051020407
  %v272 = vmul.f32 %v242, 0.0051020407
  %v273 = vmul.f32 %v247, 0.0051020407
  %v274 = vmul.f32 %v252, 0.0051020407
  %v275 = vmul.f32 %v257, 0.0051020407
  %v276 = vmul.f32 %v262, 0.0051020407
  %v278 = vsel %vm103, %v85, 0
  %v281 = vsel %vm103, %v86, 0
  %v284 = vsel %vm103, %v87, 0
  %v287 = vsel %vm103, %v88, 0
  %v290 = vsel %vm103, %v89, 0
  %v293 = vsel %vm103, %v90, 0
  %295 = vmatprep.subr.bf16.mxu0 0
  %296 = vmatpush1.bf16.msra.mxu0 0
  %297 = vmatprep.subr.bf16.mxu0 0
  %298 = vmatpush1.bf16.msra.mxu0 0
  %299 = vmatprep.subr.bf16.mxu0 0
  %300 = vmatpush1.bf16.msra.mxu0 0
  %301 = vmatprep.subr.bf16.mxu0 0
  %302 = vmatpush1.bf16.msra.mxu0 0
  %303 = vmatprep.subr.bf16.mxu0 0
  %304 = vmatpush1.bf16.msra.mxu0 0
  %305 = vmatprep.subr.bf16.mxu0 %v35
  %306 = vmatpush1.bf16.msra.mxu0 %v34
  %307 = vmatprep.subr.bf16.mxu0 %v33
  %308 = vmatpush1.bf16.msra.mxu0 %v32
  %309 = vmatprep.subr.bf16.mxu0 %v31
  %310 = vmatpush1.bf16.msra.mxu0 %v30
  %311 = vmatprep.subr.bf16.mxu0 0
  %312 = vmatpush2.bf16.msra.mxu0 0
  %313 = vmatprep.subr.bf16.mxu0 0
  %314 = vmatpush2.bf16.msra.mxu0 0
  %315 = vmatprep.subr.bf16.mxu0 0
  %316 = vmatpush2.bf16.msra.mxu0 0
  %317 = vmatprep.subr.bf16.mxu0 0
  %318 = vmatpush2.bf16.msra.mxu0 0
  %319 = vmatprep.subr.bf16.mxu0 0
  %320 = vmatpush2.bf16.msra.mxu0 0
  %321 = vmatprep.subr.bf16.mxu0 0
  %322 = vmatpush2.bf16.msra.mxu0 0
  %323 = vmatprep.subr.bf16.mxu0 0
  %324 = vmatpush2.bf16.msra.mxu0 0
  %325 = vmatprep.subr.bf16.mxu0 0
  %326 = vmatpush2.bf16.msra.mxu0 0
  %327 = vmatprep.mubr.bf16.mxu0 0
  %328 = vmatmul.mubr.bf16.gmra.mxu0 %v278
  %v329 = vpop.f32.mrf.mxu0
  %v330 = vadd.f32 0.0, %v329
  %v331 = vpop.f32.mrf.mxu0
  %v332 = vadd.f32 0.0, %v331
  %v333 = vpop.f32.mrf.mxu0
  %v334 = vadd.f32 0.0, %v333
  %v335 = vpop.f32.mrf.mxu0
  %v336 = vadd.f32 0.0, %v335
  %337 = vmatprep.mubr.bf16.mxu0 0
  %338 = vmatmul.mubr.bf16.gmra.mxu0 %v281
  %v339 = vpop.f32.mrf.mxu0
  %v340 = vadd.f32 0.0, %v339
  %v341 = vpop.f32.mrf.mxu0
  %v342 = vadd.f32 0.0, %v341
  %v343 = vpop.f32.mrf.mxu0
  %v344 = vadd.f32 0.0, %v343
  %v345 = vpop.f32.mrf.mxu0
  %v346 = vadd.f32 0.0, %v345
  %347 = vmatprep.mubr.bf16.mxu0 0
  %348 = vmatmul.mubr.bf16.gmra.mxu0 %v284
  %v349 = vpop.f32.mrf.mxu0
  %v350 = vadd.f32 0.0, %v349
  %v351 = vpop.f32.mrf.mxu0
  %v352 = vadd.f32 0.0, %v351
  %v353 = vpop.f32.mrf.mxu0
  %v354 = vadd.f32 0.0, %v353
  %v355 = vpop.f32.mrf.mxu0
  %v356 = vadd.f32 0.0, %v355
  %357 = vmatprep.mubr.bf16.mxu0 0
  %358 = vmatmul.mubr.bf16.gmra.mxu0 %v287
  %v359 = vpop.f32.mrf.mxu0
  %v360 = vadd.f32 0.0, %v359
  %v361 = vpop.f32.mrf.mxu0
  %v362 = vadd.f32 0.0, %v361
  %v363 = vpop.f32.mrf.mxu0
  %v364 = vadd.f32 0.0, %v363
  %v365 = vpop.f32.mrf.mxu0
  %v366 = vadd.f32 0.0, %v365
  %367 = vmatprep.mubr.bf16.mxu0 0
  %368 = vmatmul.mubr.bf16.gmra.mxu0 %v290
  %v369 = vpop.f32.mrf.mxu0
  %v370 = vadd.f32 0.0, %v369
  %v371 = vpop.f32.mrf.mxu0
  %v372 = vadd.f32 0.0, %v371
  %v373 = vpop.f32.mrf.mxu0
  %v374 = vadd.f32 0.0, %v373
  %v375 = vpop.f32.mrf.mxu0
  %v376 = vadd.f32 0.0, %v375
  %377 = vmatprep.mubr.bf16.mxu0 0
  %378 = vmatmul.mubr.bf16.gmra.mxu0 %v293
  %v379 = vpop.f32.mrf.mxu0
  %v380 = vadd.f32 0.0, %v379
  %v381 = vpop.f32.mrf.mxu0
  %v382 = vadd.f32 0.0, %v381
  %v383 = vpop.f32.mrf.mxu0
  %v384 = vadd.f32 0.0, %v383
  %v385 = vpop.f32.mrf.mxu0
  %v386 = vadd.f32 0.0, %v385
  %387 = vdwg.mxu0
  %389 = vset.pattern.permute.xlu0 0
  %390 = vperm.xlu0 %389, %v265
  %v391 = vpop.permute.xlu0 %390
  %394 = vset.pattern.permute.xlu0 0
  %395 = vperm.xlu0 %394, %v266
  %v396 = vpop.permute.xlu0 %395
  %399 = vset.pattern.permute.xlu0 0
  %400 = vperm.xlu0 %399, %v267
  %v401 = vpop.permute.xlu0 %400
  %404 = vset.pattern.permute.xlu0 0
  %405 = vperm.xlu0 %404, %v268
  %v406 = vpop.permute.xlu0 %405
  %409 = vset.pattern.permute.xlu0 0
  %410 = vperm.xlu0 %409, %v269
  %v411 = vpop.permute.xlu0 %410
  %414 = vset.pattern.permute.xlu0 0
  %415 = vperm.xlu0 %414, %v270
  %v416 = vpop.permute.xlu0 %415
  %419 = vset.pattern.permute.xlu0 0
  %420 = vperm.xlu0 %419, %v271
  %v421 = vpop.permute.xlu0 %420
  %424 = vset.pattern.permute.xlu0 0
  %425 = vperm.xlu0 %424, %v272
  %v426 = vpop.permute.xlu0 %425
  %429 = vset.pattern.permute.xlu0 0
  %430 = vperm.xlu0 %429, %v273
  %v431 = vpop.permute.xlu0 %430
  %434 = vset.pattern.permute.xlu0 0
  %435 = vperm.xlu0 %434, %v274
  %v436 = vpop.permute.xlu0 %435
  %439 = vset.pattern.permute.xlu0 0
  %440 = vperm.xlu0 %439, %v275
  %v441 = vpop.permute.xlu0 %440
  %444 = vset.pattern.permute.xlu0 0
  %445 = vperm.xlu0 %444, %v276
  %v446 = vpop.permute.xlu0 %445
  %v448 = vsub.f32 %v330, %v391
  %v449 = vsub.f32 %v332, %v391
  %v450 = vsub.f32 %v334, %v396
  %v451 = vsub.f32 %v336, %v396
  %v452 = vsub.f32 %v340, %v401
  %v453 = vsub.f32 %v342, %v401
  %v454 = vsub.f32 %v344, %v406
  %v455 = vsub.f32 %v346, %v406
  %v456 = vsub.f32 %v350, %v411
  %v457 = vsub.f32 %v352, %v411
  %v458 = vsub.f32 %v354, %v416
  %v459 = vsub.f32 %v356, %v416
  %v460 = vsub.f32 %v360, %v421
  %v461 = vsub.f32 %v362, %v421
  %v462 = vsub.f32 %v364, %v426
  %v463 = vsub.f32 %v366, %v426
  %v464 = vsub.f32 %v370, %v431
  %v465 = vsub.f32 %v372, %v431
  %v466 = vsub.f32 %v374, %v436
  %v467 = vsub.f32 %v376, %v436
  %v468 = vsub.f32 %v380, %v441
  %v469 = vsub.f32 %v382, %v441
  %v470 = vsub.f32 %v384, %v446
  %v471 = vsub.f32 %v386, %v446
  %v472 = vmul.f32 %v448, %v448
  %v473 = vmul.f32 %v449, %v449
  %v474 = vmul.f32 %v450, %v450
  %v475 = vmul.f32 %v451, %v451
  %v476 = vmul.f32 %v452, %v452
  %v477 = vmul.f32 %v453, %v453
  %v478 = vmul.f32 %v454, %v454
  %v479 = vmul.f32 %v455, %v455
  %v480 = vmul.f32 %v456, %v456
  %v481 = vmul.f32 %v457, %v457
  %v482 = vmul.f32 %v458, %v458
  %v483 = vmul.f32 %v459, %v459
  %v484 = vmul.f32 %v460, %v460
  %v485 = vmul.f32 %v461, %v461
  %v486 = vmul.f32 %v462, %v462
  %v487 = vmul.f32 %v463, %v463
  %v488 = vmul.f32 %v464, %v464
  %v489 = vmul.f32 %v465, %v465
  %v490 = vmul.f32 %v466, %v466
  %v491 = vmul.f32 %v467, %v467
  %v492 = vmul.f32 %v468, %v468
  %v493 = vmul.f32 %v469, %v469
  %v494 = vmul.f32 %v470, %v470
  %v495 = vmul.f32 %v471, %v471
  %v496 = vsel %vm48, %v473, 0.0
  %v497 = vadd.f32 %v472, %v496
  %498 = vadd.xlane.f32.xlu0 %v497
  %v499 = vpop.xlane.xlu0 %498
  %v500 = vsel %vm48, %v475, 0.0
  %v501 = vadd.f32 %v474, %v500
  %502 = vadd.xlane.f32.xlu0 %v501
  %v503 = vpop.xlane.xlu0 %502
  %v504 = vsel %vm48, %v477, 0.0
  %v505 = vadd.f32 %v476, %v504
  %506 = vadd.xlane.f32.xlu0 %v505
  %v507 = vpop.xlane.xlu0 %506
  %v508 = vsel %vm48, %v479, 0.0
  %v509 = vadd.f32 %v478, %v508
  %510 = vadd.xlane.f32.xlu0 %v509
  %v511 = vpop.xlane.xlu0 %510
  %v512 = vsel %vm48, %v481, 0.0
  %v513 = vadd.f32 %v480, %v512
  %514 = vadd.xlane.f32.xlu0 %v513
  %v515 = vpop.xlane.xlu0 %514
  %v516 = vsel %vm48, %v483, 0.0
  %v517 = vadd.f32 %v482, %v516
  %518 = vadd.xlane.f32.xlu0 %v517
  %v519 = vpop.xlane.xlu0 %518
  %v520 = vsel %vm48, %v485, 0.0
  %v521 = vadd.f32 %v484, %v520
  %522 = vadd.xlane.f32.xlu0 %v521
  %v523 = vpop.xlane.xlu0 %522
  %v524 = vsel %vm48, %v487, 0.0
  %v525 = vadd.f32 %v486, %v524
  %526 = vadd.xlane.f32.xlu0 %v525
  %v527 = vpop.xlane.xlu0 %526
  %v528 = vsel %vm48, %v489, 0.0
  %v529 = vadd.f32 %v488, %v528
  %530 = vadd.xlane.f32.xlu0 %v529
  %v531 = vpop.xlane.xlu0 %530
  %v532 = vsel %vm48, %v491, 0.0
  %v533 = vadd.f32 %v490, %v532
  %534 = vadd.xlane.f32.xlu0 %v533
  %v535 = vpop.xlane.xlu0 %534
  %v536 = vsel %vm48, %v493, 0.0
  %v537 = vadd.f32 %v492, %v536
  %538 = vadd.xlane.f32.xlu0 %v537
  %v539 = vpop.xlane.xlu0 %538
  %v540 = vsel %vm48, %v495, 0.0
  %v541 = vadd.f32 %v494, %v540
  %542 = vadd.xlane.f32.xlu0 %v541
  %v543 = vpop.xlane.xlu0 %542
  %v544 = vmul.f32 %v499, 0.0051020407
  %v545 = vmul.f32 %v503, 0.0051020407
  %v546 = vmul.f32 %v507, 0.0051020407
  %v547 = vmul.f32 %v511, 0.0051020407
  %v548 = vmul.f32 %v515, 0.0051020407
  %v549 = vmul.f32 %v519, 0.0051020407
  %v550 = vmul.f32 %v523, 0.0051020407
  %v551 = vmul.f32 %v527, 0.0051020407
  %v552 = vmul.f32 %v531, 0.0051020407
  %v553 = vmul.f32 %v535, 0.0051020407
  %v554 = vmul.f32 %v539, 0.0051020407
  %v555 = vmul.f32 %v543, 0.0051020407
  %v556 = vld [vmem:[%s2] sm:$0xff]
  %v557 = vld [vmem:[%s2 + $0x8] sm:$0xff]
  %v558 = vld [vmem:[%s2 + $0x10] sm:$0xff]
  %v559 = vld [vmem:[%s2 + $0x18] sm:$0xff]
  %v560 = vld [vmem:[%s2 + $0x20] sm:$0xff]
  %v561 = vld [vmem:[%s2 + $0x28] sm:$0xff]
  %v562 = vld [vmem:[%s2 + $0x30] sm:$0xff]
  %v563 = vld [vmem:[%s2 + $0x38] sm:$0xff]
  %v564 = vld [vmem:[%s2 + $0x40] sm:$0xff]
  %v565 = vld [vmem:[%s2 + $0x48] sm:$0xff]
  %v566 = vld [vmem:[%s2 + $0x50] sm:$0xff]
  %v567 = vld [vmem:[%s2 + $0x58] sm:$0xff]
  %v568 = vadd.f32 %v544, 0.001
  %v569 = vadd.f32 %v545, 0.001
  %v570 = vadd.f32 %v546, 0.001
  %v571 = vadd.f32 %v547, 0.001
  %v572 = vadd.f32 %v548, 0.001
  %v573 = vadd.f32 %v549, 0.001
  %v574 = vadd.f32 %v550, 0.001
  %v575 = vadd.f32 %v551, 0.001
  %v576 = vadd.f32 %v552, 0.001
  %v577 = vadd.f32 %v553, 0.001
  %v578 = vadd.f32 %v554, 0.001
  %v579 = vadd.f32 %v555, 0.001
  %v580 = vrsqrt.pop %v568
  %v581 = vrsqrt.pop %v569
  %v582 = vrsqrt.pop %v570
  %v583 = vrsqrt.pop %v571
  %v584 = vrsqrt.pop %v572
  %v585 = vrsqrt.pop %v573
  %v586 = vrsqrt.pop %v574
  %v587 = vrsqrt.pop %v575
  %v588 = vrsqrt.pop %v576
  %v589 = vrsqrt.pop %v577
  %v590 = vrsqrt.pop %v578
  %v591 = vrsqrt.pop %v579
  %v592 = vmul.f32 %v556, %v580
  %v593 = vmul.f32 %v557, %v581
  %v594 = vmul.f32 %v558, %v582
  %v595 = vmul.f32 %v559, %v583
  %v596 = vmul.f32 %v560, %v584
  %v597 = vmul.f32 %v561, %v585
  %v598 = vmul.f32 %v562, %v586
  %v599 = vmul.f32 %v563, %v587
  %v600 = vmul.f32 %v564, %v588
  %v601 = vmul.f32 %v565, %v589
  %v602 = vmul.f32 %v566, %v590
  %v603 = vmul.f32 %v567, %v591
  %v604 = vld [vmem:[%s3] sm:$0xff]
  %v605 = vld [vmem:[%s3 + $0x8] sm:$0xff]
  %v606 = vld [vmem:[%s3 + $0x10] sm:$0xff]
  %v607 = vld [vmem:[%s3 + $0x18] sm:$0xff]
  %v608 = vld [vmem:[%s3 + $0x20] sm:$0xff]
  %v609 = vld [vmem:[%s3 + $0x28] sm:$0xff]
  %v610 = vld [vmem:[%s3 + $0x30] sm:$0xff]
  %v611 = vld [vmem:[%s3 + $0x38] sm:$0xff]
  %v612 = vld [vmem:[%s3 + $0x40] sm:$0xff]
  %v613 = vld [vmem:[%s3 + $0x48] sm:$0xff]
  %v614 = vld [vmem:[%s3 + $0x50] sm:$0xff]
  %v615 = vld [vmem:[%s3 + $0x58] sm:$0xff]
  %617 = vset.pattern.permute.xlu0 0
  %618 = vperm.xlu0 %617, %v592
  %v619 = vpop.permute.xlu0 %618
  %622 = vset.pattern.permute.xlu0 0
  %623 = vperm.xlu0 %622, %v593
  %v624 = vpop.permute.xlu0 %623
  %627 = vset.pattern.permute.xlu0 0
  %628 = vperm.xlu0 %627, %v594
  %v629 = vpop.permute.xlu0 %628
  %632 = vset.pattern.permute.xlu0 0
  %633 = vperm.xlu0 %632, %v595
  %v634 = vpop.permute.xlu0 %633
  %637 = vset.pattern.permute.xlu0 0
  %638 = vperm.xlu0 %637, %v596
  %v639 = vpop.permute.xlu0 %638
  %642 = vset.pattern.permute.xlu0 0
  %643 = vperm.xlu0 %642, %v597
  %v644 = vpop.permute.xlu0 %643
  %647 = vset.pattern.permute.xlu0 0
  %648 = vperm.xlu0 %647, %v598
  %v649 = vpop.permute.xlu0 %648
  %652 = vset.pattern.permute.xlu0 0
  %653 = vperm.xlu0 %652, %v599
  %v654 = vpop.permute.xlu0 %653
  %657 = vset.pattern.permute.xlu0 0
  %658 = vperm.xlu0 %657, %v600
  %v659 = vpop.permute.xlu0 %658
  %662 = vset.pattern.permute.xlu0 0
  %663 = vperm.xlu0 %662, %v601
  %v664 = vpop.permute.xlu0 %663
  %667 = vset.pattern.permute.xlu0 0
  %668 = vperm.xlu0 %667, %v602
  %v669 = vpop.permute.xlu0 %668
  %672 = vset.pattern.permute.xlu0 0
  %673 = vperm.xlu0 %672, %v603
  %v674 = vpop.permute.xlu0 %673
  %v676 = vmul.f32 %v448, %v619
  %v677 = vmul.f32 %v449, %v619
  %v678 = vmul.f32 %v450, %v624
  %v679 = vmul.f32 %v451, %v624
  %v680 = vmul.f32 %v452, %v629
  %v681 = vmul.f32 %v453, %v629
  %v682 = vmul.f32 %v454, %v634
  %v683 = vmul.f32 %v455, %v634
  %v684 = vmul.f32 %v456, %v639
  %v685 = vmul.f32 %v457, %v639
  %v686 = vmul.f32 %v458, %v644
  %v687 = vmul.f32 %v459, %v644
  %v688 = vmul.f32 %v460, %v649
  %v689 = vmul.f32 %v461, %v649
  %v690 = vmul.f32 %v462, %v654
  %v691 = vmul.f32 %v463, %v654
  %v692 = vmul.f32 %v464, %v659
  %v693 = vmul.f32 %v465, %v659
  %v694 = vmul.f32 %v466, %v664
  %v695 = vmul.f32 %v467, %v664
  %v696 = vmul.f32 %v468, %v669
  %v697 = vmul.f32 %v469, %v669
  %v698 = vmul.f32 %v470, %v674
  %v699 = vmul.f32 %v471, %v674
  %701 = vset.pattern.permute.xlu0 0
  %702 = vperm.xlu0 %701, %v604
  %v703 = vpop.permute.xlu0 %702
  %706 = vset.pattern.permute.xlu0 0
  %707 = vperm.xlu0 %706, %v605
  %v708 = vpop.permute.xlu0 %707
  %711 = vset.pattern.permute.xlu0 0
  %712 = vperm.xlu0 %711, %v606
  %v713 = vpop.permute.xlu0 %712
  %716 = vset.pattern.permute.xlu0 0
  %717 = vperm.xlu0 %716, %v607
  %v718 = vpop.permute.xlu0 %717
  %721 = vset.pattern.permute.xlu0 0
  %722 = vperm.xlu0 %721, %v608
  %v723 = vpop.permute.xlu0 %722
  %726 = vset.pattern.permute.xlu0 0
  %727 = vperm.xlu0 %726, %v609
  %v728 = vpop.permute.xlu0 %727
  %731 = vset.pattern.permute.xlu0 0
  %732 = vperm.xlu0 %731, %v610
  %v733 = vpop.permute.xlu0 %732
  %736 = vset.pattern.permute.xlu0 0
  %737 = vperm.xlu0 %736, %v611
  %v738 = vpop.permute.xlu0 %737
  %741 = vset.pattern.permute.xlu0 0
  %742 = vperm.xlu0 %741, %v612
  %v743 = vpop.permute.xlu0 %742
  %746 = vset.pattern.permute.xlu0 0
  %747 = vperm.xlu0 %746, %v613
  %v748 = vpop.permute.xlu0 %747
  %751 = vset.pattern.permute.xlu0 0
  %752 = vperm.xlu0 %751, %v614
  %v753 = vpop.permute.xlu0 %752
  %756 = vset.pattern.permute.xlu0 0
  %757 = vperm.xlu0 %756, %v615
  %v758 = vpop.permute.xlu0 %757
  %v760 = vadd.f32 %v676, %v703
  %v761 = vadd.f32 %v677, %v703
  %v762 = vadd.f32 %v678, %v708
  %v763 = vadd.f32 %v679, %v708
  %v764 = vadd.f32 %v680, %v713
  %v765 = vadd.f32 %v681, %v713
  %v766 = vadd.f32 %v682, %v718
  %v767 = vadd.f32 %v683, %v718
  %v768 = vadd.f32 %v684, %v723
  %v769 = vadd.f32 %v685, %v723
  %v770 = vadd.f32 %v686, %v728
  %v771 = vadd.f32 %v687, %v728
  %v772 = vadd.f32 %v688, %v733
  %v773 = vadd.f32 %v689, %v733
  %v774 = vadd.f32 %v690, %v738
  %v775 = vadd.f32 %v691, %v738
  %v776 = vadd.f32 %v692, %v743
  %v777 = vadd.f32 %v693, %v743
  %v778 = vadd.f32 %v694, %v748
  %v779 = vadd.f32 %v695, %v748
  %v780 = vadd.f32 %v696, %v753
  %v781 = vadd.f32 %v697, %v753
  %v782 = vadd.f32 %v698, %v758
  %v783 = vadd.f32 %v699, %v758
  %s784 = smul.u32 0, 2
  %s785 = smul.addr %s784, 8
  %s786 = scalar_lea.vmem %s4, %s785
  %787 = vst [vmem:[%s786] sm:$0xff] %v760
  %788 = vst.msk [vmem:[%s786 + $0x8] sm:$0xff] %vm48, %v761
  %789 = vst [vmem:[%s786 + $0x10] sm:$0xff] %v762
  %790 = vst.msk [vmem:[%s786 + $0x18] sm:$0xff] %vm48, %v763
  %791 = vst [vmem:[%s786 + $0x20] sm:$0xff] %v764
  %792 = vst.msk [vmem:[%s786 + $0x28] sm:$0xff] %vm48, %v765
  %793 = vst [vmem:[%s786 + $0x30] sm:$0xff] %v766
  %794 = vst.msk [vmem:[%s786 + $0x38] sm:$0xff] %vm48, %v767
  %795 = vst [vmem:[%s786 + $0x40] sm:$0xff] %v768
  %796 = vst.msk [vmem:[%s786 + $0x48] sm:$0xff] %vm48, %v769
  %797 = vst [vmem:[%s786 + $0x50] sm:$0xff] %v770
  %798 = vst.msk [vmem:[%s786 + $0x58] sm:$0xff] %vm48, %v771
  %799 = vst [vmem:[%s786 + $0x60] sm:$0xff] %v772
  %800 = vst.msk [vmem:[%s786 + $0x68] sm:$0xff] %vm48, %v773
  %801 = vst [vmem:[%s786 + $0x70] sm:$0xff] %v774
  %802 = vst.msk [vmem:[%s786 + $0x78] sm:$0xff] %vm48, %v775
  %803 = vst [vmem:[%s786 + $0x80] sm:$0xff] %v776
  %804 = vst.msk [vmem:[%s786 + $0x88] sm:$0xff] %vm48, %v777
  %805 = vst [vmem:[%s786 + $0x90] sm:$0xff] %v778
  %806 = vst.msk [vmem:[%s786 + $0x98] sm:$0xff] %vm48, %v779
  %807 = vst [vmem:[%s786 + $0xa0] sm:$0xff] %v780
  %808 = vst.msk [vmem:[%s786 + $0xa8] sm:$0xff] %vm48, %v781
  %809 = vst [vmem:[%s786 + $0xb0] sm:$0xff] %v782
  %810 = vst.msk [vmem:[%s786 + $0xb8] sm:$0xff] %vm48, %v783
  %s811 = scalar_lea.vmem %s0, 96
  %v812 = vld [vmem:[%s811] sm:$0xff]
  %v813 = vld [vmem:[%s811 + $0x8] sm:$0xff]
  %v814 = vld [vmem:[%s811 + $0x10] sm:$0xff]
  %v815 = vld [vmem:[%s811 + $0x18] sm:$0xff]
  %v816 = vld [vmem:[%s811 + $0x20] sm:$0xff]
  %v817 = vld [vmem:[%s811 + $0x28] sm:$0xff]
  %v818 = vld [vmem:[%s811 + $0x30] sm:$0xff]
  %v819 = vld [vmem:[%s811 + $0x38] sm:$0xff]
  %v820 = vld [vmem:[%s811 + $0x40] sm:$0xff]
  %v821 = vld [vmem:[%s811 + $0x48] sm:$0xff]
  %v822 = vld [vmem:[%s811 + $0x50] sm:$0xff]
  %v823 = vld [vmem:[%s811 + $0x58] sm:$0xff]
  %v824 = vpack.c.bf16 %v813, %v812
  %v825 = vpack.c.bf16 %v815, %v814
  %v826 = vpack.c.bf16 %v817, %v816
  %v827 = vpack.c.bf16 %v819, %v818
  %v828 = vpack.c.bf16 %v821, %v820
  %v829 = vpack.c.bf16 %v823, %v822
  %v830 = vunpack.c.l.bf16 %v824
  %v831 = vunpack.c.h.bf16 %v824
  %v832 = vunpack.c.l.bf16 %v825
  %v833 = vunpack.c.h.bf16 %v825
  %v834 = vunpack.c.l.bf16 %v826
  %v835 = vunpack.c.h.bf16 %v826
  %v836 = vunpack.c.l.bf16 %v827
  %v837 = vunpack.c.h.bf16 %v827
  %v838 = vunpack.c.l.bf16 %v828
  %v839 = vunpack.c.h.bf16 %v828
  %v840 = vunpack.c.l.bf16 %v829
  %v841 = vunpack.c.h.bf16 %v829
  %v843 = vsel %vm103, %v830, 0
  %v846 = vsel %vm103, %v831, 0
  %v849 = vsel %vm103, %v832, 0
  %v852 = vsel %vm103, %v833, 0
  %v855 = vsel %vm103, %v834, 0
  %v858 = vsel %vm103, %v835, 0
  %v861 = vsel %vm103, %v836, 0
  %v864 = vsel %vm103, %v837, 0
  %v867 = vsel %vm103, %v838, 0
  %v870 = vsel %vm103, %v839, 0
  %v873 = vsel %vm103, %v840, 0
  %v876 = vsel %vm103, %v841, 0
  %878 = vmatprep.subr.mxu0 0.0
  %879 = vmatpush1.msra.mxu0 0.0
  %880 = vmatprep.subr.mxu0 0.0
  %881 = vmatpush1.msra.mxu0 0.0
  %882 = vmatprep.subr.mxu0 0.0
  %883 = vmatpush1.msra.mxu0 0.0
  %884 = vmatprep.subr.mxu0 0.0
  %885 = vmatpush1.msra.mxu0 0.0
  %886 = vmatprep.subr.mxu0 0.0
  %887 = vmatpush1.msra.mxu0 0.0
  %888 = vmatprep.subr.mxu0 0.0
  %889 = vmatpush1.msra.mxu0 0.0
  %890 = vmatprep.subr.mxu0 0.0
  %891 = vmatpush1.msra.mxu0 0.0
  %892 = vmatprep.subr.mxu0 0.0
  %893 = vmatpush1.msra.mxu0 0.0
  %894 = vmatprep.subr.mxu0 0.0
  %895 = vmatpush1.msra.mxu0 0.0
  %896 = vmatprep.subr.mxu0 0.0
  %897 = vmatpush1.msra.mxu0 0.0
  %898 = vmatprep.subr.mxu0 0.0
  %899 = vmatpush1.msra.mxu0 %v72
  %900 = vmatprep.subr.mxu0 0.0
  %901 = vmatpush1.msra.mxu0 %v68
  %902 = vmatprep.subr.mxu0 0.0
  %903 = vmatpush1.msra.mxu0 %v64
  %904 = vmatprep.subr.mxu0 0.0
  %905 = vmatpush1.msra.mxu0 %v60
  %906 = vmatprep.subr.mxu0 0.0
  %907 = vmatpush1.msra.mxu0 %v56
  %908 = vmatprep.subr.mxu0 0.0
  %909 = vmatpush1.msra.mxu0 %v52
  %910 = vmatprep.subr.mxu0 0.0
  %911 = vmatpush2.msra.mxu0 0.0
  %912 = vmatprep.subr.mxu0 0.0
  %913 = vmatpush2.msra.mxu0 0.0
  %914 = vmatprep.subr.mxu0 0.0
  %915 = vmatpush2.msra.mxu0 0.0
  %916 = vmatprep.subr.mxu0 0.0
  %917 = vmatpush2.msra.mxu0 0.0
  %918 = vmatprep.subr.mxu0 0.0
  %919 = vmatpush2.msra.mxu0 0.0
  %920 = vmatprep.subr.mxu0 0.0
  %921 = vmatpush2.msra.mxu0 0.0
  %922 = vmatprep.subr.mxu0 0.0
  %923 = vmatpush2.msra.mxu0 0.0
  %924 = vmatprep.subr.mxu0 0.0
  %925 = vmatpush2.msra.mxu0 0.0
  %926 = vmatprep.subr.mxu0 0.0
  %927 = vmatpush2.msra.mxu0 0.0
  %928 = vmatprep.subr.mxu0 0.0
  %929 = vmatpush2.msra.mxu0 0.0
  %930 = vmatprep.subr.mxu0 0.0
  %931 = vmatpush2.msra.mxu0 0.0
  %932 = vmatprep.subr.mxu0 0.0
  %933 = vmatpush2.msra.mxu0 0.0
  %934 = vmatprep.subr.mxu0 0.0
  %935 = vmatpush2.msra.mxu0 0.0
  %936 = vmatprep.subr.mxu0 0.0
  %937 = vmatpush2.msra.mxu0 0.0
  %938 = vmatprep.subr.mxu0 0.0
  %939 = vmatpush2.msra.mxu0 0.0
  %940 = vmatprep.subr.mxu0 0.0
  %941 = vmatpush2.msra.mxu0 0.0
  %942 = vmatprep.mubr.f32.mxu0 0.0
  %943 = vmatmul.mubr.f32.gmra.mxu0 %v843
  %v944 = vpop.f32.mrf.mxu0
  %v945 = vadd.f32 0.0, %v944
  %v946 = vpop.f32.mrf.mxu0
  %947 = vmatprep.mubr.f32.mxu0 0.0
  %948 = vmatmul.mubr.f32.gmra.mxu0 %v846
  %v949 = vpop.f32.mrf.mxu0
  %v950 = vadd.f32 0.0, %v949
  %v951 = vpop.f32.mrf.mxu0
  %952 = vmatprep.mubr.f32.mxu0 0.0
  %953 = vmatmul.mubr.f32.gmra.mxu0 %v849
  %v954 = vpop.f32.mrf.mxu0
  %v955 = vadd.f32 0.0, %v954
  %v956 = vpop.f32.mrf.mxu0
  %957 = vmatprep.mubr.f32.mxu0 0.0
  %958 = vmatmul.mubr.f32.gmra.mxu0 %v852
  %v959 = vpop.f32.mrf.mxu0
  %v960 = vadd.f32 0.0, %v959
  %v961 = vpop.f32.mrf.mxu0
  %962 = vmatprep.mubr.f32.mxu0 0.0
  %963 = vmatmul.mubr.f32.gmra.mxu0 %v855
  %v964 = vpop.f32.mrf.mxu0
  %v965 = vadd.f32 0.0, %v964
  %v966 = vpop.f32.mrf.mxu0
  %967 = vmatprep.mubr.f32.mxu0 0.0
  %968 = vmatmul.mubr.f32.gmra.mxu0 %v858
  %v969 = vpop.f32.mrf.mxu0
  %v970 = vadd.f32 0.0, %v969
  %v971 = vpop.f32.mrf.mxu0
  %972 = vmatprep.mubr.f32.mxu0 0.0
  %973 = vmatmul.mubr.f32.gmra.mxu0 %v861
  %v974 = vpop.f32.mrf.mxu0
  %v975 = vadd.f32 0.0, %v974
  %v976 = vpop.f32.mrf.mxu0
  %977 = vmatprep.mubr.f32.mxu0 0.0
  %978 = vmatmul.mubr.f32.gmra.mxu0 %v864
  %v979 = vpop.f32.mrf.mxu0
  %v980 = vadd.f32 0.0, %v979
  %v981 = vpop.f32.mrf.mxu0
  %982 = vmatprep.mubr.f32.mxu0 0.0
  %983 = vmatmul.mubr.f32.gmra.mxu0 %v867
  %v984 = vpop.f32.mrf.mxu0
  %v985 = vadd.f32 0.0, %v984
  %v986 = vpop.f32.mrf.mxu0
  %987 = vmatprep.mubr.f32.mxu0 0.0
  %988 = vmatmul.mubr.f32.gmra.mxu0 %v870
  %v989 = vpop.f32.mrf.mxu0
  %v990 = vadd.f32 0.0, %v989
  %v991 = vpop.f32.mrf.mxu0
  %992 = vmatprep.mubr.f32.mxu0 0.0
  %993 = vmatmul.mubr.f32.gmra.mxu0 %v873
  %v994 = vpop.f32.mrf.mxu0
  %v995 = vadd.f32 0.0, %v994
  %v996 = vpop.f32.mrf.mxu0
  %997 = vmatprep.mubr.f32.mxu0 0.0
  %998 = vmatmul.mubr.f32.gmra.mxu0 %v876
  %v999 = vpop.f32.mrf.mxu0
  %v1000 = vadd.f32 0.0, %v999
  %v1001 = vpop.f32.mrf.mxu0
  %1002 = vdwg.mxu0
  %v1003 = vmul.f32 %v945, 0.0051020407
  %v1004 = vmul.f32 %v950, 0.0051020407
  %v1005 = vmul.f32 %v955, 0.0051020407
  %v1006 = vmul.f32 %v960, 0.0051020407
  %v1007 = vmul.f32 %v965, 0.0051020407
  %v1008 = vmul.f32 %v970, 0.0051020407
  %v1009 = vmul.f32 %v975, 0.0051020407
  %v1010 = vmul.f32 %v980, 0.0051020407
  %v1011 = vmul.f32 %v985, 0.0051020407
  %v1012 = vmul.f32 %v990, 0.0051020407
  %v1013 = vmul.f32 %v995, 0.0051020407
  %v1014 = vmul.f32 %v1000, 0.0051020407
  %v1016 = vsel %vm103, %v824, 0
  %v1019 = vsel %vm103, %v825, 0
  %v1022 = vsel %vm103, %v826, 0
  %v1025 = vsel %vm103, %v827, 0
  %v1028 = vsel %vm103, %v828, 0
  %v1031 = vsel %vm103, %v829, 0
  %1033 = vmatprep.subr.bf16.mxu0 0
  %1034 = vmatpush1.bf16.msra.mxu0 0
  %1035 = vmatprep.subr.bf16.mxu0 0
  %1036 = vmatpush1.bf16.msra.mxu0 0
  %1037 = vmatprep.subr.bf16.mxu0 0
  %1038 = vmatpush1.bf16.msra.mxu0 0
  %1039 = vmatprep.subr.bf16.mxu0 0
  %1040 = vmatpush1.bf16.msra.mxu0 0
  %1041 = vmatprep.subr.bf16.mxu0 0
  %1042 = vmatpush1.bf16.msra.mxu0 0
  %1043 = vmatprep.subr.bf16.mxu0 %v35
  %1044 = vmatpush1.bf16.msra.mxu0 %v34
  %1045 = vmatprep.subr.bf16.mxu0 %v33
  %1046 = vmatpush1.bf16.msra.mxu0 %v32
  %1047 = vmatprep.subr.bf16.mxu0 %v31
  %1048 = vmatpush1.bf16.msra.mxu0 %v30
  %1049 = vmatprep.subr.bf16.mxu0 0
  %1050 = vmatpush2.bf16.msra.mxu0 0
  %1051 = vmatprep.subr.bf16.mxu0 0
  %1052 = vmatpush2.bf16.msra.mxu0 0
  %1053 = vmatprep.subr.bf16.mxu0 0
  %1054 = vmatpush2.bf16.msra.mxu0 0
  %1055 = vmatprep.subr.bf16.mxu0 0
  %1056 = vmatpush2.bf16.msra.mxu0 0
  %1057 = vmatprep.subr.bf16.mxu0 0
  %1058 = vmatpush2.bf16.msra.mxu0 0
  %1059 = vmatprep.subr.bf16.mxu0 0
  %1060 = vmatpush2.bf16.msra.mxu0 0
  %1061 = vmatprep.subr.bf16.mxu0 0
  %1062 = vmatpush2.bf16.msra.mxu0 0
  %1063 = vmatprep.subr.bf16.mxu0 0
  %1064 = vmatpush2.bf16.msra.mxu0 0
  %1065 = vmatprep.mubr.bf16.mxu0 0
  %1066 = vmatmul.mubr.bf16.gmra.mxu0 %v1016
  %v1067 = vpop.f32.mrf.mxu0
  %v1068 = vadd.f32 0.0, %v1067
  %v1069 = vpop.f32.mrf.mxu0
  %v1070 = vadd.f32 0.0, %v1069
  %v1071 = vpop.f32.mrf.mxu0
  %v1072 = vadd.f32 0.0, %v1071
  %v1073 = vpop.f32.mrf.mxu0
  %v1074 = vadd.f32 0.0, %v1073
  %1075 = vmatprep.mubr.bf16.mxu0 0
  %1076 = vmatmul.mubr.bf16.gmra.mxu0 %v1019
  %v1077 = vpop.f32.mrf.mxu0
  %v1078 = vadd.f32 0.0, %v1077
  %v1079 = vpop.f32.mrf.mxu0
  %v1080 = vadd.f32 0.0, %v1079
  %v1081 = vpop.f32.mrf.mxu0
  %v1082 = vadd.f32 0.0, %v1081
  %v1083 = vpop.f32.mrf.mxu0
  %v1084 = vadd.f32 0.0, %v1083
  %1085 = vmatprep.mubr.bf16.mxu0 0
  %1086 = vmatmul.mubr.bf16.gmra.mxu0 %v1022
  %v1087 = vpop.f32.mrf.mxu0
  %v1088 = vadd.f32 0.0, %v1087
  %v1089 = vpop.f32.mrf.mxu0
  %v1090 = vadd.f32 0.0, %v1089
  %v1091 = vpop.f32.mrf.mxu0
  %v1092 = vadd.f32 0.0, %v1091
  %v1093 = vpop.f32.mrf.mxu0
  %v1094 = vadd.f32 0.0, %v1093
  %1095 = vmatprep.mubr.bf16.mxu0 0
  %1096 = vmatmul.mubr.bf16.gmra.mxu0 %v1025
  %v1097 = vpop.f32.mrf.mxu0
  %v1098 = vadd.f32 0.0, %v1097
  %v1099 = vpop.f32.mrf.mxu0
  %v1100 = vadd.f32 0.0, %v1099
  %v1101 = vpop.f32.mrf.mxu0
  %v1102 = vadd.f32 0.0, %v1101
  %v1103 = vpop.f32.mrf.mxu0
  %v1104 = vadd.f32 0.0, %v1103
  %1105 = vmatprep.mubr.bf16.mxu0 0
  %1106 = vmatmul.mubr.bf16.gmra.mxu0 %v1028
  %v1107 = vpop.f32.mrf.mxu0
  %v1108 = vadd.f32 0.0, %v1107
  %v1109 = vpop.f32.mrf.mxu0
  %v1110 = vadd.f32 0.0, %v1109
  %v1111 = vpop.f32.mrf.mxu0
  %v1112 = vadd.f32 0.0, %v1111
  %v1113 = vpop.f32.mrf.mxu0
  %v1114 = vadd.f32 0.0, %v1113
  %1115 = vmatprep.mubr.bf16.mxu0 0
  %1116 = vmatmul.mubr.bf16.gmra.mxu0 %v1031
  %v1117 = vpop.f32.mrf.mxu0
  %v1118 = vadd.f32 0.0, %v1117
  %v1119 = vpop.f32.mrf.mxu0
  %v1120 = vadd.f32 0.0, %v1119
  %v1121 = vpop.f32.mrf.mxu0
  %v1122 = vadd.f32 0.0, %v1121
  %v1123 = vpop.f32.mrf.mxu0
  %v1124 = vadd.f32 0.0, %v1123
  %1125 = vdwg.mxu0
  %1127 = vset.pattern.permute.xlu0 0
  %1128 = vperm.xlu0 %1127, %v1003
  %v1129 = vpop.permute.xlu0 %1128
  %1132 = vset.pattern.permute.xlu0 0
  %1133 = vperm.xlu0 %1132, %v1004
  %v1134 = vpop.permute.xlu0 %1133
  %1137 = vset.pattern.permute.xlu0 0
  %1138 = vperm.xlu0 %1137, %v1005
  %v1139 = vpop.permute.xlu0 %1138
  %1142 = vset.pattern.permute.xlu0 0
  %1143 = vperm.xlu0 %1142, %v1006
  %v1144 = vpop.permute.xlu0 %1143
  %1147 = vset.pattern.permute.xlu0 0
  %1148 = vperm.xlu0 %1147, %v1007
  %v1149 = vpop.permute.xlu0 %1148
  %1152 = vset.pattern.permute.xlu0 0
  %1153 = vperm.xlu0 %1152, %v1008
  %v1154 = vpop.permute.xlu0 %1153
  %1157 = vset.pattern.permute.xlu0 0
  %1158 = vperm.xlu0 %1157, %v1009
  %v1159 = vpop.permute.xlu0 %1158
  %1162 = vset.pattern.permute.xlu0 0
  %1163 = vperm.xlu0 %1162, %v1010
  %v1164 = vpop.permute.xlu0 %1163
  %1167 = vset.pattern.permute.xlu0 0
  %1168 = vperm.xlu0 %1167, %v1011
  %v1169 = vpop.permute.xlu0 %1168
  %1172 = vset.pattern.permute.xlu0 0
  %1173 = vperm.xlu0 %1172, %v1012
  %v1174 = vpop.permute.xlu0 %1173
  %1177 = vset.pattern.permute.xlu0 0
  %1178 = vperm.xlu0 %1177, %v1013
  %v1179 = vpop.permute.xlu0 %1178
  %1182 = vset.pattern.permute.xlu0 0
  %1183 = vperm.xlu0 %1182, %v1014
  %v1184 = vpop.permute.xlu0 %1183
  %v1186 = vsub.f32 %v1068, %v1129
  %v1187 = vsub.f32 %v1070, %v1129
  %v1188 = vsub.f32 %v1072, %v1134
  %v1189 = vsub.f32 %v1074, %v1134
  %v1190 = vsub.f32 %v1078, %v1139
  %v1191 = vsub.f32 %v1080, %v1139
  %v1192 = vsub.f32 %v1082, %v1144
  %v1193 = vsub.f32 %v1084, %v1144
  %v1194 = vsub.f32 %v1088, %v1149
  %v1195 = vsub.f32 %v1090, %v1149
  %v1196 = vsub.f32 %v1092, %v1154
  %v1197 = vsub.f32 %v1094, %v1154
  %v1198 = vsub.f32 %v1098, %v1159
  %v1199 = vsub.f32 %v1100, %v1159
  %v1200 = vsub.f32 %v1102, %v1164
  %v1201 = vsub.f32 %v1104, %v1164
  %v1202 = vsub.f32 %v1108, %v1169
  %v1203 = vsub.f32 %v1110, %v1169
  %v1204 = vsub.f32 %v1112, %v1174
  %v1205 = vsub.f32 %v1114, %v1174
  %v1206 = vsub.f32 %v1118, %v1179
  %v1207 = vsub.f32 %v1120, %v1179
  %v1208 = vsub.f32 %v1122, %v1184
  %v1209 = vsub.f32 %v1124, %v1184
  %v1210 = vmul.f32 %v1186, %v1186
  %v1211 = vmul.f32 %v1187, %v1187
  %v1212 = vmul.f32 %v1188, %v1188
  %v1213 = vmul.f32 %v1189, %v1189
  %v1214 = vmul.f32 %v1190, %v1190
  %v1215 = vmul.f32 %v1191, %v1191
  %v1216 = vmul.f32 %v1192, %v1192
  %v1217 = vmul.f32 %v1193, %v1193
  %v1218 = vmul.f32 %v1194, %v1194
  %v1219 = vmul.f32 %v1195, %v1195
  %v1220 = vmul.f32 %v1196, %v1196
  %v1221 = vmul.f32 %v1197, %v1197
  %v1222 = vmul.f32 %v1198, %v1198
  %v1223 = vmul.f32 %v1199, %v1199
  %v1224 = vmul.f32 %v1200, %v1200
  %v1225 = vmul.f32 %v1201, %v1201
  %v1226 = vmul.f32 %v1202, %v1202
  %v1227 = vmul.f32 %v1203, %v1203
  %v1228 = vmul.f32 %v1204, %v1204
  %v1229 = vmul.f32 %v1205, %v1205
  %v1230 = vmul.f32 %v1206, %v1206
  %v1231 = vmul.f32 %v1207, %v1207
  %v1232 = vmul.f32 %v1208, %v1208
  %v1233 = vmul.f32 %v1209, %v1209
  %v1234 = vsel %vm48, %v1211, 0.0
  %v1235 = vadd.f32 %v1210, %v1234
  %1236 = vadd.xlane.f32.xlu0 %v1235
  %v1237 = vpop.xlane.xlu0 %1236
  %v1238 = vsel %vm48, %v1213, 0.0
  %v1239 = vadd.f32 %v1212, %v1238
  %1240 = vadd.xlane.f32.xlu0 %v1239
  %v1241 = vpop.xlane.xlu0 %1240
  %v1242 = vsel %vm48, %v1215, 0.0
  %v1243 = vadd.f32 %v1214, %v1242
  %1244 = vadd.xlane.f32.xlu0 %v1243
  %v1245 = vpop.xlane.xlu0 %1244
  %v1246 = vsel %vm48, %v1217, 0.0
  %v1247 = vadd.f32 %v1216, %v1246
  %1248 = vadd.xlane.f32.xlu0 %v1247
  %v1249 = vpop.xlane.xlu0 %1248
  %v1250 = vsel %vm48, %v1219, 0.0
  %v1251 = vadd.f32 %v1218, %v1250
  %1252 = vadd.xlane.f32.xlu0 %v1251
  %v1253 = vpop.xlane.xlu0 %1252
  %v1254 = vsel %vm48, %v1221, 0.0
  %v1255 = vadd.f32 %v1220, %v1254
  %1256 = vadd.xlane.f32.xlu0 %v1255
  %v1257 = vpop.xlane.xlu0 %1256
  %v1258 = vsel %vm48, %v1223, 0.0
  %v1259 = vadd.f32 %v1222, %v1258
  %1260 = vadd.xlane.f32.xlu0 %v1259
  %v1261 = vpop.xlane.xlu0 %1260
  %v1262 = vsel %vm48, %v1225, 0.0
  %v1263 = vadd.f32 %v1224, %v1262
  %1264 = vadd.xlane.f32.xlu0 %v1263
  %v1265 = vpop.xlane.xlu0 %1264
  %v1266 = vsel %vm48, %v1227, 0.0
  %v1267 = vadd.f32 %v1226, %v1266
  %1268 = vadd.xlane.f32.xlu0 %v1267
  %v1269 = vpop.xlane.xlu0 %1268
  %v1270 = vsel %vm48, %v1229, 0.0
  %v1271 = vadd.f32 %v1228, %v1270
  %1272 = vadd.xlane.f32.xlu0 %v1271
  %v1273 = vpop.xlane.xlu0 %1272
  %v1274 = vsel %vm48, %v1231, 0.0
  %v1275 = vadd.f32 %v1230, %v1274
  %1276 = vadd.xlane.f32.xlu0 %v1275
  %v1277 = vpop.xlane.xlu0 %1276
  %v1278 = vsel %vm48, %v1233, 0.0
  %v1279 = vadd.f32 %v1232, %v1278
  %1280 = vadd.xlane.f32.xlu0 %v1279
  %v1281 = vpop.xlane.xlu0 %1280
  %v1282 = vmul.f32 %v1237, 0.0051020407
  %v1283 = vmul.f32 %v1241, 0.0051020407
  %v1284 = vmul.f32 %v1245, 0.0051020407
  %v1285 = vmul.f32 %v1249, 0.0051020407
  %v1286 = vmul.f32 %v1253, 0.0051020407
  %v1287 = vmul.f32 %v1257, 0.0051020407
  %v1288 = vmul.f32 %v1261, 0.0051020407
  %v1289 = vmul.f32 %v1265, 0.0051020407
  %v1290 = vmul.f32 %v1269, 0.0051020407
  %v1291 = vmul.f32 %v1273, 0.0051020407
  %v1292 = vmul.f32 %v1277, 0.0051020407
  %v1293 = vmul.f32 %v1281, 0.0051020407
  %s1294 = scalar_lea.vmem %s2, 96
  %v1295 = vld [vmem:[%s1294] sm:$0xff]
  %v1296 = vld [vmem:[%s1294 + $0x8] sm:$0xff]
  %v1297 = vld [vmem:[%s1294 + $0x10] sm:$0xff]
  %v1298 = vld [vmem:[%s1294 + $0x18] sm:$0xff]
  %v1299 = vld [vmem:[%s1294 + $0x20] sm:$0xff]
  %v1300 = vld [vmem:[%s1294 + $0x28] sm:$0xff]
  %v1301 = vld [vmem:[%s1294 + $0x30] sm:$0xff]
  %v1302 = vld [vmem:[%s1294 + $0x38] sm:$0xff]
  %v1303 = vld [vmem:[%s1294 + $0x40] sm:$0xff]
  %v1304 = vld [vmem:[%s1294 + $0x48] sm:$0xff]
  %v1305 = vld [vmem:[%s1294 + $0x50] sm:$0xff]
  %v1306 = vld [vmem:[%s1294 + $0x58] sm:$0xff]
  %v1307 = vadd.f32 %v1282, 0.001
  %v1308 = vadd.f32 %v1283, 0.001
  %v1309 = vadd.f32 %v1284, 0.001
  %v1310 = vadd.f32 %v1285, 0.001
  %v1311 = vadd.f32 %v1286, 0.001
  %v1312 = vadd.f32 %v1287, 0.001
  %v1313 = vadd.f32 %v1288, 0.001
  %v1314 = vadd.f32 %v1289, 0.001
  %v1315 = vadd.f32 %v1290, 0.001
  %v1316 = vadd.f32 %v1291, 0.001
  %v1317 = vadd.f32 %v1292, 0.001
  %v1318 = vadd.f32 %v1293, 0.001
  %v1319 = vrsqrt.pop %v1307
  %v1320 = vrsqrt.pop %v1308
  %v1321 = vrsqrt.pop %v1309
  %v1322 = vrsqrt.pop %v1310
  %v1323 = vrsqrt.pop %v1311
  %v1324 = vrsqrt.pop %v1312
  %v1325 = vrsqrt.pop %v1313
  %v1326 = vrsqrt.pop %v1314
  %v1327 = vrsqrt.pop %v1315
  %v1328 = vrsqrt.pop %v1316
  %v1329 = vrsqrt.pop %v1317
  %v1330 = vrsqrt.pop %v1318
  %v1331 = vmul.f32 %v1295, %v1319
  %v1332 = vmul.f32 %v1296, %v1320
  %v1333 = vmul.f32 %v1297, %v1321
  %v1334 = vmul.f32 %v1298, %v1322
  %v1335 = vmul.f32 %v1299, %v1323
  %v1336 = vmul.f32 %v1300, %v1324
  %v1337 = vmul.f32 %v1301, %v1325
  %v1338 = vmul.f32 %v1302, %v1326
  %v1339 = vmul.f32 %v1303, %v1327
  %v1340 = vmul.f32 %v1304, %v1328
  %v1341 = vmul.f32 %v1305, %v1329
  %v1342 = vmul.f32 %v1306, %v1330
  %s1343 = scalar_lea.vmem %s3, 96
  %v1344 = vld [vmem:[%s1343] sm:$0xff]
  %v1345 = vld [vmem:[%s1343 + $0x8] sm:$0xff]
  %v1346 = vld [vmem:[%s1343 + $0x10] sm:$0xff]
  %v1347 = vld [vmem:[%s1343 + $0x18] sm:$0xff]
  %v1348 = vld [vmem:[%s1343 + $0x20] sm:$0xff]
  %v1349 = vld [vmem:[%s1343 + $0x28] sm:$0xff]
  %v1350 = vld [vmem:[%s1343 + $0x30] sm:$0xff]
  %v1351 = vld [vmem:[%s1343 + $0x38] sm:$0xff]
  %v1352 = vld [vmem:[%s1343 + $0x40] sm:$0xff]
  %v1353 = vld [vmem:[%s1343 + $0x48] sm:$0xff]
  %v1354 = vld [vmem:[%s1343 + $0x50] sm:$0xff]
  %v1355 = vld [vmem:[%s1343 + $0x58] sm:$0xff]
  %1357 = vset.pattern.permute.xlu0 0
  %1358 = vperm.xlu0 %1357, %v1331
  %v1359 = vpop.permute.xlu0 %1358
  %1362 = vset.pattern.permute.xlu0 0
  %1363 = vperm.xlu0 %1362, %v1332
  %v1364 = vpop.permute.xlu0 %1363
  %1367 = vset.pattern.permute.xlu0 0
  %1368 = vperm.xlu0 %1367, %v1333
  %v1369 = vpop.permute.xlu0 %1368
  %1372 = vset.pattern.permute.xlu0 0
  %1373 = vperm.xlu0 %1372, %v1334
  %v1374 = vpop.permute.xlu0 %1373
  %1377 = vset.pattern.permute.xlu0 0
  %1378 = vperm.xlu0 %1377, %v1335
  %v1379 = vpop.permute.xlu0 %1378
  %1382 = vset.pattern.permute.xlu0 0
  %1383 = vperm.xlu0 %1382, %v1336
  %v1384 = vpop.permute.xlu0 %1383
  %1387 = vset.pattern.permute.xlu0 0
  %1388 = vperm.xlu0 %1387, %v1337
  %v1389 = vpop.permute.xlu0 %1388
  %1392 = vset.pattern.permute.xlu0 0
  %1393 = vperm.xlu0 %1392, %v1338
  %v1394 = vpop.permute.xlu0 %1393
  %1397 = vset.pattern.permute.xlu0 0
  %1398 = vperm.xlu0 %1397, %v1339
  %v1399 = vpop.permute.xlu0 %1398
  %1402 = vset.pattern.permute.xlu0 0
  %1403 = vperm.xlu0 %1402, %v1340
  %v1404 = vpop.permute.xlu0 %1403
  %1407 = vset.pattern.permute.xlu0 0
  %1408 = vperm.xlu0 %1407, %v1341
  %v1409 = vpop.permute.xlu0 %1408
  %1412 = vset.pattern.permute.xlu0 0
  %1413 = vperm.xlu0 %1412, %v1342
  %v1414 = vpop.permute.xlu0 %1413
  %v1416 = vmul.f32 %v1186, %v1359
  %v1417 = vmul.f32 %v1187, %v1359
  %v1418 = vmul.f32 %v1188, %v1364
  %v1419 = vmul.f32 %v1189, %v1364
  %v1420 = vmul.f32 %v1190, %v1369
  %v1421 = vmul.f32 %v1191, %v1369
  %v1422 = vmul.f32 %v1192, %v1374
  %v1423 = vmul.f32 %v1193, %v1374
  %v1424 = vmul.f32 %v1194, %v1379
  %v1425 = vmul.f32 %v1195, %v1379
  %v1426 = vmul.f32 %v1196, %v1384
  %v1427 = vmul.f32 %v1197, %v1384
  %v1428 = vmul.f32 %v1198, %v1389
  %v1429 = vmul.f32 %v1199, %v1389
  %v1430 = vmul.f32 %v1200, %v1394
  %v1431 = vmul.f32 %v1201, %v1394
  %v1432 = vmul.f32 %v1202, %v1399
  %v1433 = vmul.f32 %v1203, %v1399
  %v1434 = vmul.f32 %v1204, %v1404
  %v1435 = vmul.f32 %v1205, %v1404
  %v1436 = vmul.f32 %v1206, %v1409
  %v1437 = vmul.f32 %v1207, %v1409
  %v1438 = vmul.f32 %v1208, %v1414
  %v1439 = vmul.f32 %v1209, %v1414
  %1441 = vset.pattern.permute.xlu0 0
  %1442 = vperm.xlu0 %1441, %v1344
  %v1443 = vpop.permute.xlu0 %1442
  %1446 = vset.pattern.permute.xlu0 0
  %1447 = vperm.xlu0 %1446, %v1345
  %v1448 = vpop.permute.xlu0 %1447
  %1451 = vset.pattern.permute.xlu0 0
  %1452 = vperm.xlu0 %1451, %v1346
  %v1453 = vpop.permute.xlu0 %1452
  %1456 = vset.pattern.permute.xlu0 0
  %1457 = vperm.xlu0 %1456, %v1347
  %v1458 = vpop.permute.xlu0 %1457
  %1461 = vset.pattern.permute.xlu0 0
  %1462 = vperm.xlu0 %1461, %v1348
  %v1463 = vpop.permute.xlu0 %1462
  %1466 = vset.pattern.permute.xlu0 0
  %1467 = vperm.xlu0 %1466, %v1349
  %v1468 = vpop.permute.xlu0 %1467
  %1471 = vset.pattern.permute.xlu0 0
  %1472 = vperm.xlu0 %1471, %v1350
  %v1473 = vpop.permute.xlu0 %1472
  %1476 = vset.pattern.permute.xlu0 0
  %1477 = vperm.xlu0 %1476, %v1351
  %v1478 = vpop.permute.xlu0 %1477
  %1481 = vset.pattern.permute.xlu0 0
  %1482 = vperm.xlu0 %1481, %v1352
  %v1483 = vpop.permute.xlu0 %1482
  %1486 = vset.pattern.permute.xlu0 0
  %1487 = vperm.xlu0 %1486, %v1353
  %v1488 = vpop.permute.xlu0 %1487
  %1491 = vset.pattern.permute.xlu0 0
  %1492 = vperm.xlu0 %1491, %v1354
  %v1493 = vpop.permute.xlu0 %1492
  %1496 = vset.pattern.permute.xlu0 0
  %1497 = vperm.xlu0 %1496, %v1355
  %v1498 = vpop.permute.xlu0 %1497
  %v1500 = vadd.f32 %v1416, %v1443
  %v1501 = vadd.f32 %v1417, %v1443
  %v1502 = vadd.f32 %v1418, %v1448
  %v1503 = vadd.f32 %v1419, %v1448
  %v1504 = vadd.f32 %v1420, %v1453
  %v1505 = vadd.f32 %v1421, %v1453
  %v1506 = vadd.f32 %v1422, %v1458
  %v1507 = vadd.f32 %v1423, %v1458
  %v1508 = vadd.f32 %v1424, %v1463
  %v1509 = vadd.f32 %v1425, %v1463
  %v1510 = vadd.f32 %v1426, %v1468
  %v1511 = vadd.f32 %v1427, %v1468
  %v1512 = vadd.f32 %v1428, %v1473
  %v1513 = vadd.f32 %v1429, %v1473
  %v1514 = vadd.f32 %v1430, %v1478
  %v1515 = vadd.f32 %v1431, %v1478
  %v1516 = vadd.f32 %v1432, %v1483
  %v1517 = vadd.f32 %v1433, %v1483
  %v1518 = vadd.f32 %v1434, %v1488
  %v1519 = vadd.f32 %v1435, %v1488
  %v1520 = vadd.f32 %v1436, %v1493
  %v1521 = vadd.f32 %v1437, %v1493
  %v1522 = vadd.f32 %v1438, %v1498
  %v1523 = vadd.f32 %v1439, %v1498
  %s1524 = smul.u32 12, 2
  %s1525 = smul.addr %s1524, 8
  %s1526 = scalar_lea.vmem %s4, %s1525
  %1527 = vst [vmem:[%s1526] sm:$0xff] %v1500
  %1528 = vst.msk [vmem:[%s1526 + $0x8] sm:$0xff] %vm48, %v1501
  %1529 = vst [vmem:[%s1526 + $0x10] sm:$0xff] %v1502
  %1530 = vst.msk [vmem:[%s1526 + $0x18] sm:$0xff] %vm48, %v1503
  %1531 = vst [vmem:[%s1526 + $0x20] sm:$0xff] %v1504
  %1532 = vst.msk [vmem:[%s1526 + $0x28] sm:$0xff] %vm48, %v1505
  %1533 = vst [vmem:[%s1526 + $0x30] sm:$0xff] %v1506
  %1534 = vst.msk [vmem:[%s1526 + $0x38] sm:$0xff] %vm48, %v1507
  %1535 = vst [vmem:[%s1526 + $0x40] sm:$0xff] %v1508
  %1536 = vst.msk [vmem:[%s1526 + $0x48] sm:$0xff] %vm48, %v1509
  %1537 = vst [vmem:[%s1526 + $0x50] sm:$0xff] %v1510
  %1538 = vst.msk [vmem:[%s1526 + $0x58] sm:$0xff] %vm48, %v1511
  %1539 = vst [vmem:[%s1526 + $0x60] sm:$0xff] %v1512
  %1540 = vst.msk [vmem:[%s1526 + $0x68] sm:$0xff] %vm48, %v1513
  %1541 = vst [vmem:[%s1526 + $0x70] sm:$0xff] %v1514
  %1542 = vst.msk [vmem:[%s1526 + $0x78] sm:$0xff] %vm48, %v1515
  %1543 = vst [vmem:[%s1526 + $0x80] sm:$0xff] %v1516
  %1544 = vst.msk [vmem:[%s1526 + $0x88] sm:$0xff] %vm48, %v1517
  %1545 = vst [vmem:[%s1526 + $0x90] sm:$0xff] %v1518
  %1546 = vst.msk [vmem:[%s1526 + $0x98] sm:$0xff] %vm48, %v1519
  %1547 = vst [vmem:[%s1526 + $0xa0] sm:$0xff] %v1520
  %1548 = vst.msk [vmem:[%s1526 + $0xa8] sm:$0xff] %vm48, %v1521
  %1549 = vst [vmem:[%s1526 + $0xb0] sm:$0xff] %v1522
  %1550 = vst.msk [vmem:[%s1526 + $0xb8] sm:$0xff] %vm48, %v1523
  %s1551 = scalar_lea.vmem %s0, 192
  %v1552 = vld [vmem:[%s1551] sm:$0xff]
  %v1553 = vld [vmem:[%s1551 + $0x8] sm:$0xff]
  %v1554 = vld [vmem:[%s1551 + $0x10] sm:$0xff]
  %v1555 = vld [vmem:[%s1551 + $0x18] sm:$0xff]
  %v1556 = vld [vmem:[%s1551 + $0x20] sm:$0xff]
  %v1557 = vld [vmem:[%s1551 + $0x28] sm:$0xff]
  %v1558 = vld [vmem:[%s1551 + $0x30] sm:$0xff]
  %v1559 = vld [vmem:[%s1551 + $0x38] sm:$0xff]
  %v1560 = vld [vmem:[%s1551 + $0x40] sm:$0xff]
  %v1561 = vld [vmem:[%s1551 + $0x48] sm:$0xff]
  %v1562 = vld [vmem:[%s1551 + $0x50] sm:$0xff]
  %v1563 = vld [vmem:[%s1551 + $0x58] sm:$0xff]
  %v1564 = vpack.c.bf16 %v1553, %v1552
  %v1565 = vpack.c.bf16 %v1555, %v1554
  %v1566 = vpack.c.bf16 %v1557, %v1556
  %v1567 = vpack.c.bf16 %v1559, %v1558
  %v1568 = vpack.c.bf16 %v1561, %v1560
  %v1569 = vpack.c.bf16 %v1563, %v1562
  %v1570 = vunpack.c.l.bf16 %v1564
  %v1571 = vunpack.c.h.bf16 %v1564
  %v1572 = vunpack.c.l.bf16 %v1565
  %v1573 = vunpack.c.h.bf16 %v1565
  %v1574 = vunpack.c.l.bf16 %v1566
  %v1575 = vunpack.c.h.bf16 %v1566
  %v1576 = vunpack.c.l.bf16 %v1567
  %v1577 = vunpack.c.h.bf16 %v1567
  %v1578 = vunpack.c.l.bf16 %v1568
  %v1579 = vunpack.c.h.bf16 %v1568
  %v1580 = vunpack.c.l.bf16 %v1569
  %v1581 = vunpack.c.h.bf16 %v1569
  %v1583 = vsel %vm103, %v1570, 0
  %v1586 = vsel %vm103, %v1571, 0
  %v1589 = vsel %vm103, %v1572, 0
  %v1592 = vsel %vm103, %v1573, 0
  %v1595 = vsel %vm103, %v1574, 0
  %v1598 = vsel %vm103, %v1575, 0
  %v1601 = vsel %vm103, %v1576, 0
  %v1604 = vsel %vm103, %v1577, 0
  %v1607 = vsel %vm103, %v1578, 0
  %v1610 = vsel %vm103, %v1579, 0
  %v1613 = vsel %vm103, %v1580, 0
  %v1616 = vsel %vm103, %v1581, 0
  %1618 = vmatprep.subr.mxu0 0.0
  %1619 = vmatpush1.msra.mxu0 0.0
  %1620 = vmatprep.subr.mxu0 0.0
  %1621 = vmatpush1.msra.mxu0 0.0
  %1622 = vmatprep.subr.mxu0 0.0
  %1623 = vmatpush1.msra.mxu0 0.0
  %1624 = vmatprep.subr.mxu0 0.0
  %1625 = vmatpush1.msra.mxu0 0.0
  %1626 = vmatprep.subr.mxu0 0.0
  %1627 = vmatpush1.msra.mxu0 0.0
  %1628 = vmatprep.subr.mxu0 0.0
  %1629 = vmatpush1.msra.mxu0 0.0
  %1630 = vmatprep.subr.mxu0 0.0
  %1631 = vmatpush1.msra.mxu0 0.0
  %1632 = vmatprep.subr.mxu0 0.0
  %1633 = vmatpush1.msra.mxu0 0.0
  %1634 = vmatprep.subr.mxu0 0.0
  %1635 = vmatpush1.msra.mxu0 0.0
  %1636 = vmatprep.subr.mxu0 0.0
  %1637 = vmatpush1.msra.mxu0 0.0
  %1638 = vmatprep.subr.mxu0 0.0
  %1639 = vmatpush1.msra.mxu0 %v72
  %1640 = vmatprep.subr.mxu0 0.0
  %1641 = vmatpush1.msra.mxu0 %v68
  %1642 = vmatprep.subr.mxu0 0.0
  %1643 = vmatpush1.msra.mxu0 %v64
  %1644 = vmatprep.subr.mxu0 0.0
  %1645 = vmatpush1.msra.mxu0 %v60
  %1646 = vmatprep.subr.mxu0 0.0
  %1647 = vmatpush1.msra.mxu0 %v56
  %1648 = vmatprep.subr.mxu0 0.0
  %1649 = vmatpush1.msra.mxu0 %v52
  %1650 = vmatprep.subr.mxu0 0.0
  %1651 = vmatpush2.msra.mxu0 0.0
  %1652 = vmatprep.subr.mxu0 0.0
  %1653 = vmatpush2.msra.mxu0 0.0
  %1654 = vmatprep.subr.mxu0 0.0
  %1655 = vmatpush2.msra.mxu0 0.0
  %1656 = vmatprep.subr.mxu0 0.0
  %1657 = vmatpush2.msra.mxu0 0.0
  %1658 = vmatprep.subr.mxu0 0.0
  %1659 = vmatpush2.msra.mxu0 0.0
  %1660 = vmatprep.subr.mxu0 0.0
  %1661 = vmatpush2.msra.mxu0 0.0
  %1662 = vmatprep.subr.mxu0 0.0
  %1663 = vmatpush2.msra.mxu0 0.0
  %1664 = vmatprep.subr.mxu0 0.0
  %1665 = vmatpush2.msra.mxu0 0.0
  %1666 = vmatprep.subr.mxu0 0.0
  %1667 = vmatpush2.msra.mxu0 0.0
  %1668 = vmatprep.subr.mxu0 0.0
  %1669 = vmatpush2.msra.mxu0 0.0
  %1670 = vmatprep.subr.mxu0 0.0
  %1671 = vmatpush2.msra.mxu0 0.0
  %1672 = vmatprep.subr.mxu0 0.0
  %1673 = vmatpush2.msra.mxu0 0.0
  %1674 = vmatprep.subr.mxu0 0.0
  %1675 = vmatpush2.msra.mxu0 0.0
  %1676 = vmatprep.subr.mxu0 0.0
  %1677 = vmatpush2.msra.mxu0 0.0
  %1678 = vmatprep.subr.mxu0 0.0
  %1679 = vmatpush2.msra.mxu0 0.0
  %1680 = vmatprep.subr.mxu0 0.0
  %1681 = vmatpush2.msra.mxu0 0.0
  %1682 = vmatprep.mubr.f32.mxu0 0.0
  %1683 = vmatmul.mubr.f32.gmra.mxu0 %v1583
  %v1684 = vpop.f32.mrf.mxu0
  %v1685 = vadd.f32 0.0, %v1684
  %v1686 = vpop.f32.mrf.mxu0
  %1687 = vmatprep.mubr.f32.mxu0 0.0
  %1688 = vmatmul.mubr.f32.gmra.mxu0 %v1586
  %v1689 = vpop.f32.mrf.mxu0
  %v1690 = vadd.f32 0.0, %v1689
  %v1691 = vpop.f32.mrf.mxu0
  %1692 = vmatprep.mubr.f32.mxu0 0.0
  %1693 = vmatmul.mubr.f32.gmra.mxu0 %v1589
  %v1694 = vpop.f32.mrf.mxu0
  %v1695 = vadd.f32 0.0, %v1694
  %v1696 = vpop.f32.mrf.mxu0
  %1697 = vmatprep.mubr.f32.mxu0 0.0
  %1698 = vmatmul.mubr.f32.gmra.mxu0 %v1592
  %v1699 = vpop.f32.mrf.mxu0
  %v1700 = vadd.f32 0.0, %v1699
  %v1701 = vpop.f32.mrf.mxu0
  %1702 = vmatprep.mubr.f32.mxu0 0.0
  %1703 = vmatmul.mubr.f32.gmra.mxu0 %v1595
  %v1704 = vpop.f32.mrf.mxu0
  %v1705 = vadd.f32 0.0, %v1704
  %v1706 = vpop.f32.mrf.mxu0
  %1707 = vmatprep.mubr.f32.mxu0 0.0
  %1708 = vmatmul.mubr.f32.gmra.mxu0 %v1598
  %v1709 = vpop.f32.mrf.mxu0
  %v1710 = vadd.f32 0.0, %v1709
  %v1711 = vpop.f32.mrf.mxu0
  %1712 = vmatprep.mubr.f32.mxu0 0.0
  %1713 = vmatmul.mubr.f32.gmra.mxu0 %v1601
  %v1714 = vpop.f32.mrf.mxu0
  %v1715 = vadd.f32 0.0, %v1714
  %v1716 = vpop.f32.mrf.mxu0
  %1717 = vmatprep.mubr.f32.mxu0 0.0
  %1718 = vmatmul.mubr.f32.gmra.mxu0 %v1604
  %v1719 = vpop.f32.mrf.mxu0
  %v1720 = vadd.f32 0.0, %v1719
  %v1721 = vpop.f32.mrf.mxu0
  %1722 = vmatprep.mubr.f32.mxu0 0.0
  %1723 = vmatmul.mubr.f32.gmra.mxu0 %v1607
  %v1724 = vpop.f32.mrf.mxu0
  %v1725 = vadd.f32 0.0, %v1724
  %v1726 = vpop.f32.mrf.mxu0
  %1727 = vmatprep.mubr.f32.mxu0 0.0
  %1728 = vmatmul.mubr.f32.gmra.mxu0 %v1610
  %v1729 = vpop.f32.mrf.mxu0
  %v1730 = vadd.f32 0.0, %v1729
  %v1731 = vpop.f32.mrf.mxu0
  %1732 = vmatprep.mubr.f32.mxu0 0.0
  %1733 = vmatmul.mubr.f32.gmra.mxu0 %v1613
  %v1734 = vpop.f32.mrf.mxu0
  %v1735 = vadd.f32 0.0, %v1734
  %v1736 = vpop.f32.mrf.mxu0
  %1737 = vmatprep.mubr.f32.mxu0 0.0
  %1738 = vmatmul.mubr.f32.gmra.mxu0 %v1616
  %v1739 = vpop.f32.mrf.mxu0
  %v1740 = vadd.f32 0.0, %v1739
  %v1741 = vpop.f32.mrf.mxu0
  %1742 = vdwg.mxu0
  %v1743 = vmul.f32 %v1685, 0.0051020407
  %v1744 = vmul.f32 %v1690, 0.0051020407
  %v1745 = vmul.f32 %v1695, 0.0051020407
  %v1746 = vmul.f32 %v1700, 0.0051020407
  %v1747 = vmul.f32 %v1705, 0.0051020407
  %v1748 = vmul.f32 %v1710, 0.0051020407
  %v1749 = vmul.f32 %v1715, 0.0051020407
  %v1750 = vmul.f32 %v1720, 0.0051020407
  %v1751 = vmul.f32 %v1725, 0.0051020407
  %v1752 = vmul.f32 %v1730, 0.0051020407
  %v1753 = vmul.f32 %v1735, 0.0051020407
  %v1754 = vmul.f32 %v1740, 0.0051020407
  %v1756 = vsel %vm103, %v1564, 0
  %v1759 = vsel %vm103, %v1565, 0
  %v1762 = vsel %vm103, %v1566, 0
  %v1765 = vsel %vm103, %v1567, 0
  %v1768 = vsel %vm103, %v1568, 0
  %v1771 = vsel %vm103, %v1569, 0
  %1773 = vmatprep.subr.bf16.mxu0 0
  %1774 = vmatpush1.bf16.msra.mxu0 0
  %1775 = vmatprep.subr.bf16.mxu0 0
  %1776 = vmatpush1.bf16.msra.mxu0 0
  %1777 = vmatprep.subr.bf16.mxu0 0
  %1778 = vmatpush1.bf16.msra.mxu0 0
  %1779 = vmatprep.subr.bf16.mxu0 0
  %1780 = vmatpush1.bf16.msra.mxu0 0
  %1781 = vmatprep.subr.bf16.mxu0 0
  %1782 = vmatpush1.bf16.msra.mxu0 0
  %1783 = vmatprep.subr.bf16.mxu0 %v35
  %1784 = vmatpush1.bf16.msra.mxu0 %v34
  %1785 = vmatprep.subr.bf16.mxu0 %v33
  %1786 = vmatpush1.bf16.msra.mxu0 %v32
  %1787 = vmatprep.subr.bf16.mxu0 %v31
  %1788 = vmatpush1.bf16.msra.mxu0 %v30
  %1789 = vmatprep.subr.bf16.mxu0 0
  %1790 = vmatpush2.bf16.msra.mxu0 0
  %1791 = vmatprep.subr.bf16.mxu0 0
  %1792 = vmatpush2.bf16.msra.mxu0 0
  %1793 = vmatprep.subr.bf16.mxu0 0
  %1794 = vmatpush2.bf16.msra.mxu0 0
  %1795 = vmatprep.subr.bf16.mxu0 0
  %1796 = vmatpush2.bf16.msra.mxu0 0
  %1797 = vmatprep.subr.bf16.mxu0 0
  %1798 = vmatpush2.bf16.msra.mxu0 0
  %1799 = vmatprep.subr.bf16.mxu0 0
  %1800 = vmatpush2.bf16.msra.mxu0 0
  %1801 = vmatprep.subr.bf16.mxu0 0
  %1802 = vmatpush2.bf16.msra.mxu0 0
  %1803 = vmatprep.subr.bf16.mxu0 0
  %1804 = vmatpush2.bf16.msra.mxu0 0
  %1805 = vmatprep.mubr.bf16.mxu0 0
  %1806 = vmatmul.mubr.bf16.gmra.mxu0 %v1756
  %v1807 = vpop.f32.mrf.mxu0
  %v1808 = vadd.f32 0.0, %v1807
  %v1809 = vpop.f32.mrf.mxu0
  %v1810 = vadd.f32 0.0, %v1809
  %v1811 = vpop.f32.mrf.mxu0
  %v1812 = vadd.f32 0.0, %v1811
  %v1813 = vpop.f32.mrf.mxu0
  %v1814 = vadd.f32 0.0, %v1813
  %1815 = vmatprep.mubr.bf16.mxu0 0
  %1816 = vmatmul.mubr.bf16.gmra.mxu0 %v1759
  %v1817 = vpop.f32.mrf.mxu0
  %v1818 = vadd.f32 0.0, %v1817
  %v1819 = vpop.f32.mrf.mxu0
  %v1820 = vadd.f32 0.0, %v1819
  %v1821 = vpop.f32.mrf.mxu0
  %v1822 = vadd.f32 0.0, %v1821
  %v1823 = vpop.f32.mrf.mxu0
  %v1824 = vadd.f32 0.0, %v1823
  %1825 = vmatprep.mubr.bf16.mxu0 0
  %1826 = vmatmul.mubr.bf16.gmra.mxu0 %v1762
  %v1827 = vpop.f32.mrf.mxu0
  %v1828 = vadd.f32 0.0, %v1827
  %v1829 = vpop.f32.mrf.mxu0
  %v1830 = vadd.f32 0.0, %v1829
  %v1831 = vpop.f32.mrf.mxu0
  %v1832 = vadd.f32 0.0, %v1831
  %v1833 = vpop.f32.mrf.mxu0
  %v1834 = vadd.f32 0.0, %v1833
  %1835 = vmatprep.mubr.bf16.mxu0 0
  %1836 = vmatmul.mubr.bf16.gmra.mxu0 %v1765
  %v1837 = vpop.f32.mrf.mxu0
  %v1838 = vadd.f32 0.0, %v1837
  %v1839 = vpop.f32.mrf.mxu0
  %v1840 = vadd.f32 0.0, %v1839
  %v1841 = vpop.f32.mrf.mxu0
  %v1842 = vadd.f32 0.0, %v1841
  %v1843 = vpop.f32.mrf.mxu0
  %v1844 = vadd.f32 0.0, %v1843
  %1845 = vmatprep.mubr.bf16.mxu0 0
  %1846 = vmatmul.mubr.bf16.gmra.mxu0 %v1768
  %v1847 = vpop.f32.mrf.mxu0
  %v1848 = vadd.f32 0.0, %v1847
  %v1849 = vpop.f32.mrf.mxu0
  %v1850 = vadd.f32 0.0, %v1849
  %v1851 = vpop.f32.mrf.mxu0
  %v1852 = vadd.f32 0.0, %v1851
  %v1853 = vpop.f32.mrf.mxu0
  %v1854 = vadd.f32 0.0, %v1853
  %1855 = vmatprep.mubr.bf16.mxu0 0
  %1856 = vmatmul.mubr.bf16.gmra.mxu0 %v1771
  %v1857 = vpop.f32.mrf.mxu0
  %v1858 = vadd.f32 0.0, %v1857
  %v1859 = vpop.f32.mrf.mxu0
  %v1860 = vadd.f32 0.0, %v1859
  %v1861 = vpop.f32.mrf.mxu0
  %v1862 = vadd.f32 0.0, %v1861
  %v1863 = vpop.f32.mrf.mxu0
  %v1864 = vadd.f32 0.0, %v1863
  %1865 = vdwg.mxu0
  %1867 = vset.pattern.permute.xlu0 0
  %1868 = vperm.xlu0 %1867, %v1743
  %v1869 = vpop.permute.xlu0 %1868
  %1872 = vset.pattern.permute.xlu0 0
  %1873 = vperm.xlu0 %1872, %v1744
  %v1874 = vpop.permute.xlu0 %1873
  %1877 = vset.pattern.permute.xlu0 0
  %1878 = vperm.xlu0 %1877, %v1745
  %v1879 = vpop.permute.xlu0 %1878
  %1882 = vset.pattern.permute.xlu0 0
  %1883 = vperm.xlu0 %1882, %v1746
  %v1884 = vpop.permute.xlu0 %1883
  %1887 = vset.pattern.permute.xlu0 0
  %1888 = vperm.xlu0 %1887, %v1747
  %v1889 = vpop.permute.xlu0 %1888
  %1892 = vset.pattern.permute.xlu0 0
  %1893 = vperm.xlu0 %1892, %v1748
  %v1894 = vpop.permute.xlu0 %1893
  %1897 = vset.pattern.permute.xlu0 0
  %1898 = vperm.xlu0 %1897, %v1749
  %v1899 = vpop.permute.xlu0 %1898
  %1902 = vset.pattern.permute.xlu0 0
  %1903 = vperm.xlu0 %1902, %v1750
  %v1904 = vpop.permute.xlu0 %1903
  %1907 = vset.pattern.permute.xlu0 0
  %1908 = vperm.xlu0 %1907, %v1751
  %v1909 = vpop.permute.xlu0 %1908
  %1912 = vset.pattern.permute.xlu0 0
  %1913 = vperm.xlu0 %1912, %v1752
  %v1914 = vpop.permute.xlu0 %1913
  %1917 = vset.pattern.permute.xlu0 0
  %1918 = vperm.xlu0 %1917, %v1753
  %v1919 = vpop.permute.xlu0 %1918
  %1922 = vset.pattern.permute.xlu0 0
  %1923 = vperm.xlu0 %1922, %v1754
  %v1924 = vpop.permute.xlu0 %1923
  %v1926 = vsub.f32 %v1808, %v1869
  %v1927 = vsub.f32 %v1810, %v1869
  %v1928 = vsub.f32 %v1812, %v1874
  %v1929 = vsub.f32 %v1814, %v1874
  %v1930 = vsub.f32 %v1818, %v1879
  %v1931 = vsub.f32 %v1820, %v1879
  %v1932 = vsub.f32 %v1822, %v1884
  %v1933 = vsub.f32 %v1824, %v1884
  %v1934 = vsub.f32 %v1828, %v1889
  %v1935 = vsub.f32 %v1830, %v1889
  %v1936 = vsub.f32 %v1832, %v1894
  %v1937 = vsub.f32 %v1834, %v1894
  %v1938 = vsub.f32 %v1838, %v1899
  %v1939 = vsub.f32 %v1840, %v1899
  %v1940 = vsub.f32 %v1842, %v1904
  %v1941 = vsub.f32 %v1844, %v1904
  %v1942 = vsub.f32 %v1848, %v1909
  %v1943 = vsub.f32 %v1850, %v1909
  %v1944 = vsub.f32 %v1852, %v1914
  %v1945 = vsub.f32 %v1854, %v1914
  %v1946 = vsub.f32 %v1858, %v1919
  %v1947 = vsub.f32 %v1860, %v1919
  %v1948 = vsub.f32 %v1862, %v1924
  %v1949 = vsub.f32 %v1864, %v1924
  %v1950 = vmul.f32 %v1926, %v1926
  %v1951 = vmul.f32 %v1927, %v1927
  %v1952 = vmul.f32 %v1928, %v1928
  %v1953 = vmul.f32 %v1929, %v1929
  %v1954 = vmul.f32 %v1930, %v1930
  %v1955 = vmul.f32 %v1931, %v1931
  %v1956 = vmul.f32 %v1932, %v1932
  %v1957 = vmul.f32 %v1933, %v1933
  %v1958 = vmul.f32 %v1934, %v1934
  %v1959 = vmul.f32 %v1935, %v1935
  %v1960 = vmul.f32 %v1936, %v1936
  %v1961 = vmul.f32 %v1937, %v1937
  %v1962 = vmul.f32 %v1938, %v1938
  %v1963 = vmul.f32 %v1939, %v1939
  %v1964 = vmul.f32 %v1940, %v1940
  %v1965 = vmul.f32 %v1941, %v1941
  %v1966 = vmul.f32 %v1942, %v1942
  %v1967 = vmul.f32 %v1943, %v1943
  %v1968 = vmul.f32 %v1944, %v1944
  %v1969 = vmul.f32 %v1945, %v1945
  %v1970 = vmul.f32 %v1946, %v1946
  %v1971 = vmul.f32 %v1947, %v1947
  %v1972 = vmul.f32 %v1948, %v1948
  %v1973 = vmul.f32 %v1949, %v1949
  %v1974 = vsel %vm48, %v1951, 0.0
  %v1975 = vadd.f32 %v1950, %v1974
  %1976 = vadd.xlane.f32.xlu0 %v1975
  %v1977 = vpop.xlane.xlu0 %1976
  %v1978 = vsel %vm48, %v1953, 0.0
  %v1979 = vadd.f32 %v1952, %v1978
  %1980 = vadd.xlane.f32.xlu0 %v1979
  %v1981 = vpop.xlane.xlu0 %1980
  %v1982 = vsel %vm48, %v1955, 0.0
  %v1983 = vadd.f32 %v1954, %v1982
  %1984 = vadd.xlane.f32.xlu0 %v1983
  %v1985 = vpop.xlane.xlu0 %1984
  %v1986 = vsel %vm48, %v1957, 0.0
  %v1987 = vadd.f32 %v1956, %v1986
  %1988 = vadd.xlane.f32.xlu0 %v1987
  %v1989 = vpop.xlane.xlu0 %1988
  %v1990 = vsel %vm48, %v1959, 0.0
  %v1991 = vadd.f32 %v1958, %v1990
  %1992 = vadd.xlane.f32.xlu0 %v1991
  %v1993 = vpop.xlane.xlu0 %1992
  %v1994 = vsel %vm48, %v1961, 0.0
  %v1995 = vadd.f32 %v1960, %v1994
  %1996 = vadd.xlane.f32.xlu0 %v1995
  %v1997 = vpop.xlane.xlu0 %1996
  %v1998 = vsel %vm48, %v1963, 0.0
  %v1999 = vadd.f32 %v1962, %v1998
  %2000 = vadd.xlane.f32.xlu0 %v1999
  %v2001 = vpop.xlane.xlu0 %2000
  %v2002 = vsel %vm48, %v1965, 0.0
  %v2003 = vadd.f32 %v1964, %v2002
  %2004 = vadd.xlane.f32.xlu0 %v2003
  %v2005 = vpop.xlane.xlu0 %2004
  %v2006 = vsel %vm48, %v1967, 0.0
  %v2007 = vadd.f32 %v1966, %v2006
  %2008 = vadd.xlane.f32.xlu0 %v2007
  %v2009 = vpop.xlane.xlu0 %2008
  %v2010 = vsel %vm48, %v1969, 0.0
  %v2011 = vadd.f32 %v1968, %v2010
  %2012 = vadd.xlane.f32.xlu0 %v2011
  %v2013 = vpop.xlane.xlu0 %2012
  %v2014 = vsel %vm48, %v1971, 0.0
  %v2015 = vadd.f32 %v1970, %v2014
  %2016 = vadd.xlane.f32.xlu0 %v2015
  %v2017 = vpop.xlane.xlu0 %2016
  %v2018 = vsel %vm48, %v1973, 0.0
  %v2019 = vadd.f32 %v1972, %v2018
  %2020 = vadd.xlane.f32.xlu0 %v2019
  %v2021 = vpop.xlane.xlu0 %2020
  %v2022 = vmul.f32 %v1977, 0.0051020407
  %v2023 = vmul.f32 %v1981, 0.0051020407
  %v2024 = vmul.f32 %v1985, 0.0051020407
  %v2025 = vmul.f32 %v1989, 0.0051020407
  %v2026 = vmul.f32 %v1993, 0.0051020407
  %v2027 = vmul.f32 %v1997, 0.0051020407
  %v2028 = vmul.f32 %v2001, 0.0051020407
  %v2029 = vmul.f32 %v2005, 0.0051020407
  %v2030 = vmul.f32 %v2009, 0.0051020407
  %v2031 = vmul.f32 %v2013, 0.0051020407
  %v2032 = vmul.f32 %v2017, 0.0051020407
  %v2033 = vmul.f32 %v2021, 0.0051020407
  %s2034 = scalar_lea.vmem %s2, 192
  %v2035 = vld [vmem:[%s2034] sm:$0xff]
  %v2036 = vld [vmem:[%s2034 + $0x8] sm:$0xff]
  %v2037 = vld [vmem:[%s2034 + $0x10] sm:$0xff]
  %v2038 = vld [vmem:[%s2034 + $0x18] sm:$0xff]
  %v2039 = vld [vmem:[%s2034 + $0x20] sm:$0xff]
  %v2040 = vld [vmem:[%s2034 + $0x28] sm:$0xff]
  %v2041 = vld [vmem:[%s2034 + $0x30] sm:$0xff]
  %v2042 = vld [vmem:[%s2034 + $0x38] sm:$0xff]
  %v2043 = vld [vmem:[%s2034 + $0x40] sm:$0xff]
  %v2044 = vld [vmem:[%s2034 + $0x48] sm:$0xff]
  %v2045 = vld [vmem:[%s2034 + $0x50] sm:$0xff]
  %v2046 = vld [vmem:[%s2034 + $0x58] sm:$0xff]
  %v2047 = vadd.f32 %v2022, 0.001
  %v2048 = vadd.f32 %v2023, 0.001
  %v2049 = vadd.f32 %v2024, 0.001
  %v2050 = vadd.f32 %v2025, 0.001
  %v2051 = vadd.f32 %v2026, 0.001
  %v2052 = vadd.f32 %v2027, 0.001
  %v2053 = vadd.f32 %v2028, 0.001
  %v2054 = vadd.f32 %v2029, 0.001
  %v2055 = vadd.f32 %v2030, 0.001
  %v2056 = vadd.f32 %v2031, 0.001
  %v2057 = vadd.f32 %v2032, 0.001
  %v2058 = vadd.f32 %v2033, 0.001
  %v2059 = vrsqrt.pop %v2047
  %v2060 = vrsqrt.pop %v2048
  %v2061 = vrsqrt.pop %v2049
  %v2062 = vrsqrt.pop %v2050
  %v2063 = vrsqrt.pop %v2051
  %v2064 = vrsqrt.pop %v2052
  %v2065 = vrsqrt.pop %v2053
  %v2066 = vrsqrt.pop %v2054
  %v2067 = vrsqrt.pop %v2055
  %v2068 = vrsqrt.pop %v2056
  %v2069 = vrsqrt.pop %v2057
  %v2070 = vrsqrt.pop %v2058
  %v2071 = vmul.f32 %v2035, %v2059
  %v2072 = vmul.f32 %v2036, %v2060
  %v2073 = vmul.f32 %v2037, %v2061
  %v2074 = vmul.f32 %v2038, %v2062
  %v2075 = vmul.f32 %v2039, %v2063
  %v2076 = vmul.f32 %v2040, %v2064
  %v2077 = vmul.f32 %v2041, %v2065
  %v2078 = vmul.f32 %v2042, %v2066
  %v2079 = vmul.f32 %v2043, %v2067
  %v2080 = vmul.f32 %v2044, %v2068
  %v2081 = vmul.f32 %v2045, %v2069
  %v2082 = vmul.f32 %v2046, %v2070
  %s2083 = scalar_lea.vmem %s3, 192
  %v2084 = vld [vmem:[%s2083] sm:$0xff]
  %v2085 = vld [vmem:[%s2083 + $0x8] sm:$0xff]
  %v2086 = vld [vmem:[%s2083 + $0x10] sm:$0xff]
  %v2087 = vld [vmem:[%s2083 + $0x18] sm:$0xff]
  %v2088 = vld [vmem:[%s2083 + $0x20] sm:$0xff]
  %v2089 = vld [vmem:[%s2083 + $0x28] sm:$0xff]
  %v2090 = vld [vmem:[%s2083 + $0x30] sm:$0xff]
  %v2091 = vld [vmem:[%s2083 + $0x38] sm:$0xff]
  %v2092 = vld [vmem:[%s2083 + $0x40] sm:$0xff]
  %v2093 = vld [vmem:[%s2083 + $0x48] sm:$0xff]
  %v2094 = vld [vmem:[%s2083 + $0x50] sm:$0xff]
  %v2095 = vld [vmem:[%s2083 + $0x58] sm:$0xff]
  %2097 = vset.pattern.permute.xlu0 0
  %2098 = vperm.xlu0 %2097, %v2071
  %v2099 = vpop.permute.xlu0 %2098
  %2102 = vset.pattern.permute.xlu0 0
  %2103 = vperm.xlu0 %2102, %v2072
  %v2104 = vpop.permute.xlu0 %2103
  %2107 = vset.pattern.permute.xlu0 0
  %2108 = vperm.xlu0 %2107, %v2073
  %v2109 = vpop.permute.xlu0 %2108
  %2112 = vset.pattern.permute.xlu0 0
  %2113 = vperm.xlu0 %2112, %v2074
  %v2114 = vpop.permute.xlu0 %2113
  %2117 = vset.pattern.permute.xlu0 0
  %2118 = vperm.xlu0 %2117, %v2075
  %v2119 = vpop.permute.xlu0 %2118
  %2122 = vset.pattern.permute.xlu0 0
  %2123 = vperm.xlu0 %2122, %v2076
  %v2124 = vpop.permute.xlu0 %2123
  %2127 = vset.pattern.permute.xlu0 0
  %2128 = vperm.xlu0 %2127, %v2077
  %v2129 = vpop.permute.xlu0 %2128
  %2132 = vset.pattern.permute.xlu0 0
  %2133 = vperm.xlu0 %2132, %v2078
  %v2134 = vpop.permute.xlu0 %2133
  %2137 = vset.pattern.permute.xlu0 0
  %2138 = vperm.xlu0 %2137, %v2079
  %v2139 = vpop.permute.xlu0 %2138
  %2142 = vset.pattern.permute.xlu0 0
  %2143 = vperm.xlu0 %2142, %v2080
  %v2144 = vpop.permute.xlu0 %2143
  %2147 = vset.pattern.permute.xlu0 0
  %2148 = vperm.xlu0 %2147, %v2081
  %v2149 = vpop.permute.xlu0 %2148
  %2152 = vset.pattern.permute.xlu0 0
  %2153 = vperm.xlu0 %2152, %v2082
  %v2154 = vpop.permute.xlu0 %2153
  %v2156 = vmul.f32 %v1926, %v2099
  %v2157 = vmul.f32 %v1927, %v2099
  %v2158 = vmul.f32 %v1928, %v2104
  %v2159 = vmul.f32 %v1929, %v2104
  %v2160 = vmul.f32 %v1930, %v2109
  %v2161 = vmul.f32 %v1931, %v2109
  %v2162 = vmul.f32 %v1932, %v2114
  %v2163 = vmul.f32 %v1933, %v2114
  %v2164 = vmul.f32 %v1934, %v2119
  %v2165 = vmul.f32 %v1935, %v2119
  %v2166 = vmul.f32 %v1936, %v2124
  %v2167 = vmul.f32 %v1937, %v2124
  %v2168 = vmul.f32 %v1938, %v2129
  %v2169 = vmul.f32 %v1939, %v2129
  %v2170 = vmul.f32 %v1940, %v2134
  %v2171 = vmul.f32 %v1941, %v2134
  %v2172 = vmul.f32 %v1942, %v2139
  %v2173 = vmul.f32 %v1943, %v2139
  %v2174 = vmul.f32 %v1944, %v2144
  %v2175 = vmul.f32 %v1945, %v2144
  %v2176 = vmul.f32 %v1946, %v2149
  %v2177 = vmul.f32 %v1947, %v2149
  %v2178 = vmul.f32 %v1948, %v2154
  %v2179 = vmul.f32 %v1949, %v2154
  %2181 = vset.pattern.permute.xlu0 0
  %2182 = vperm.xlu0 %2181, %v2084
  %v2183 = vpop.permute.xlu0 %2182
  %2186 = vset.pattern.permute.xlu0 0
  %2187 = vperm.xlu0 %2186, %v2085
  %v2188 = vpop.permute.xlu0 %2187
  %2191 = vset.pattern.permute.xlu0 0
  %2192 = vperm.xlu0 %2191, %v2086
  %v2193 = vpop.permute.xlu0 %2192
  %2196 = vset.pattern.permute.xlu0 0
  %2197 = vperm.xlu0 %2196, %v2087
  %v2198 = vpop.permute.xlu0 %2197
  %2201 = vset.pattern.permute.xlu0 0
  %2202 = vperm.xlu0 %2201, %v2088
  %v2203 = vpop.permute.xlu0 %2202
  %2206 = vset.pattern.permute.xlu0 0
  %2207 = vperm.xlu0 %2206, %v2089
  %v2208 = vpop.permute.xlu0 %2207
  %2211 = vset.pattern.permute.xlu0 0
  %2212 = vperm.xlu0 %2211, %v2090
  %v2213 = vpop.permute.xlu0 %2212
  %2216 = vset.pattern.permute.xlu0 0
  %2217 = vperm.xlu0 %2216, %v2091
  %v2218 = vpop.permute.xlu0 %2217
  %2221 = vset.pattern.permute.xlu0 0
  %2222 = vperm.xlu0 %2221, %v2092
  %v2223 = vpop.permute.xlu0 %2222
  %2226 = vset.pattern.permute.xlu0 0
  %2227 = vperm.xlu0 %2226, %v2093
  %v2228 = vpop.permute.xlu0 %2227
  %2231 = vset.pattern.permute.xlu0 0
  %2232 = vperm.xlu0 %2231, %v2094
  %v2233 = vpop.permute.xlu0 %2232
  %2236 = vset.pattern.permute.xlu0 0
  %2237 = vperm.xlu0 %2236, %v2095
  %v2238 = vpop.permute.xlu0 %2237
  %v2240 = vadd.f32 %v2156, %v2183
  %v2241 = vadd.f32 %v2157, %v2183
  %v2242 = vadd.f32 %v2158, %v2188
  %v2243 = vadd.f32 %v2159, %v2188
  %v2244 = vadd.f32 %v2160, %v2193
  %v2245 = vadd.f32 %v2161, %v2193
  %v2246 = vadd.f32 %v2162, %v2198
  %v2247 = vadd.f32 %v2163, %v2198
  %v2248 = vadd.f32 %v2164, %v2203
  %v2249 = vadd.f32 %v2165, %v2203
  %v2250 = vadd.f32 %v2166, %v2208
  %v2251 = vadd.f32 %v2167, %v2208
  %v2252 = vadd.f32 %v2168, %v2213
  %v2253 = vadd.f32 %v2169, %v2213
  %v2254 = vadd.f32 %v2170, %v2218
  %v2255 = vadd.f32 %v2171, %v2218
  %v2256 = vadd.f32 %v2172, %v2223
  %v2257 = vadd.f32 %v2173, %v2223
  %v2258 = vadd.f32 %v2174, %v2228
  %v2259 = vadd.f32 %v2175, %v2228
  %v2260 = vadd.f32 %v2176, %v2233
  %v2261 = vadd.f32 %v2177, %v2233
  %v2262 = vadd.f32 %v2178, %v2238
  %v2263 = vadd.f32 %v2179, %v2238
  %s2264 = smul.u32 24, 2
  %s2265 = smul.addr %s2264, 8
  %s2266 = scalar_lea.vmem %s4, %s2265
  %2267 = vst [vmem:[%s2266] sm:$0xff] %v2240
  %2268 = vst.msk [vmem:[%s2266 + $0x8] sm:$0xff] %vm48, %v2241
  %2269 = vst [vmem:[%s2266 + $0x10] sm:$0xff] %v2242
  %2270 = vst.msk [vmem:[%s2266 + $0x18] sm:$0xff] %vm48, %v2243
  %2271 = vst [vmem:[%s2266 + $0x20] sm:$0xff] %v2244
  %2272 = vst.msk [vmem:[%s2266 + $0x28] sm:$0xff] %vm48, %v2245
  %2273 = vst [vmem:[%s2266 + $0x30] sm:$0xff] %v2246
  %2274 = vst.msk [vmem:[%s2266 + $0x38] sm:$0xff] %vm48, %v2247
  %2275 = vst [vmem:[%s2266 + $0x40] sm:$0xff] %v2248
  %2276 = vst.msk [vmem:[%s2266 + $0x48] sm:$0xff] %vm48, %v2249
  %2277 = vst [vmem:[%s2266 + $0x50] sm:$0xff] %v2250
  %2278 = vst.msk [vmem:[%s2266 + $0x58] sm:$0xff] %vm48, %v2251
  %2279 = vst [vmem:[%s2266 + $0x60] sm:$0xff] %v2252
  %2280 = vst.msk [vmem:[%s2266 + $0x68] sm:$0xff] %vm48, %v2253
  %2281 = vst [vmem:[%s2266 + $0x70] sm:$0xff] %v2254
  %2282 = vst.msk [vmem:[%s2266 + $0x78] sm:$0xff] %vm48, %v2255
  %2283 = vst [vmem:[%s2266 + $0x80] sm:$0xff] %v2256
  %2284 = vst.msk [vmem:[%s2266 + $0x88] sm:$0xff] %vm48, %v2257
  %2285 = vst [vmem:[%s2266 + $0x90] sm:$0xff] %v2258
  %2286 = vst.msk [vmem:[%s2266 + $0x98] sm:$0xff] %vm48, %v2259
  %2287 = vst [vmem:[%s2266 + $0xa0] sm:$0xff] %v2260
  %2288 = vst.msk [vmem:[%s2266 + $0xa8] sm:$0xff] %vm48, %v2261
  %2289 = vst [vmem:[%s2266 + $0xb0] sm:$0xff] %v2262
  %2290 = vst.msk [vmem:[%s2266 + $0xb8] sm:$0xff] %vm48, %v2263
  // Predicated region
  $region18: #{conv1x1_bn.1} parent=0 // pred_check
    _
  $region19: #{conv1x1_bn.1} parent=0 // pred_check_branch
    %2292 = sbr.rel (0) target = $region21
  $region20: #{conv1x1_bn.1} parent=0 // pred_region
    _
  $region21: #{conv1x1_bn.1} parent=0 // pred_fallthru
    _
  // Predicated region
  $region22: #{conv1x1_bn.1} parent=0 // pred_check
    _
  $region23: #{conv1x1_bn.1} parent=0 // pred_check_branch
    %2294 = sbr.rel (0) target = $region25
  $region24: #{conv1x1_bn.1} parent=0 // pred_region
    _
  $region25: #{conv1x1_bn.1} parent=0 // pred_fallthru
    _

</llo_original>
